<compile_context>
chip_gen: v6e
topology: v6e:2x2x1
jax: 0.10.0
libtpu: 0.0.40
codegen_flags: <defaults>
</compile_context>

<pallas_src>
import math
from functools import partial

import jax
import jax.numpy as jnp
from jax import lax
from jax.experimental import pallas as pl
from jax.experimental.pallas import tpu as pltpu


def mha_kernel(x_ref, wqkv_ref, bqkv_ref, wprojh_ref, bproj_ref, o_ref, *,
               n_heads, head_dim, block_b, seq_len):
    Bb, T, D = block_b, seq_len, head_dim
    C = n_heads * D
    cdt = x_ref.dtype                                   # matmul operand dtype (f32 or bf16)

    # ---- fused QKV projection over the whole batch block: one (Bb*T, C) x (C, 3C) matmul.
    x2d = x_ref[...].reshape(Bb * T, C)
    qkv = jnp.dot(x2d, wqkv_ref[...], preferred_element_type=jnp.float32)
    qkv = (qkv + bqkv_ref[0].astype(jnp.float32)).astype(cdt)        # (Bb*T, 3C)

    # ---- split into (H*Bb, T, D) tensors with the head axis leading, so the attention
    #      matmuls are single head-batched dot_generals.  3C axis layout is [3, H, D].
    def heads(sel):
        base = sel * C
        pieces = [qkv[:, base + h * D: base + (h + 1) * D].reshape(Bb, T, D)
                  for h in range(n_heads)]
        return jnp.stack(pieces, axis=0).reshape(n_heads * Bb, T, D)

    q, k, v = heads(0), heads(1), heads(2)

    # ---- causal softmax attention, batched over all (head, batch) pairs.
    #      (1/sqrt(D) is already folded into the Q projection weights wrapper-side;
    #       no explicit k.T — the einsum contracts the last dims directly.)
    s = jnp.einsum('ntd,nsd->nts', q, k, preferred_element_type=jnp.float32)
    row = lax.broadcasted_iota(jnp.int32, (T, T), 0)
    col = lax.broadcasted_iota(jnp.int32, (T, T), 1)
    s = jnp.where((row >= col)[None], s, jnp.float32(-1e30))         # finite mask (NaN-safe)
    s = s - jnp.max(s, axis=-1, keepdims=True)
    p = jnp.exp(s)
    p = p * pl.reciprocal(jnp.sum(p, axis=-1, keepdims=True), approx=True)
    ctx = jnp.einsum('nts,nsd->ntd', p.astype(cdt), v,
                     preferred_element_type=jnp.float32)             # (H*Bb, T, D), f32

    # ---- head merge + output projection fused: proj(concat_h ctx_h) == sum_h ctx_h @ Wproj_h.
    ctx = ctx.reshape(n_heads, Bb * T, D).astype(cdt)                 # heads leading
    out2d = jnp.einsum('hnd,hdc->hnc', ctx, wprojh_ref[...],
                       preferred_element_type=jnp.float32).sum(axis=0)  # (Bb*T, C)
    out2d = out2d + bproj_ref[0].astype(jnp.float32)

    # ---- lane-dense store: fold (T, C) into a single T*C-wide lane axis (256 lanes here),
    #      so the output write is an unmasked full-width store. Wrapper reshapes back.
    out3 = out2d.reshape(Bb, T, C)
    out_wide = jnp.concatenate([out3[:, t:t + 1, :] for t in range(T)], axis=-1)  # (Bb, 1, T*C)
    o_ref[0] = out_wide.astype(o_ref.dtype)


def mha_forward(x, wqkv, bqkv, wproj, bproj, *, n_heads, block_b=None, compute_dtype=None):
    """x: (B, T, C). Weights stored (in_dim, out_dim); biases (1, out_dim)."""
    B, T, C = x.shape
    assert C % n_heads == 0
    D = C // n_heads
    if compute_dtype is None:
        compute_dtype = x.dtype                 # use jnp.bfloat16 on v6e/v7x for MXU speed
    if block_b is None:
        # Batch-block the grid; keep 2 grid steps when possible so v7x megacore
        # ("parallel" semantics) can still shard across its 2 TensorCores.
        block_b = B // 2 if (B % 2 == 0 and B >= 2) else B
    assert B % block_b == 0
    num_blocks = B // block_b

    # Fold the 1/sqrt(D) attention scale into the Q projection (free, wrapper-side).
    scale = 1.0 / math.sqrt(D)
    wqkv_eff = wqkv.at[:, :C].multiply(scale).astype(compute_dtype)
    bqkv_eff = bqkv.at[:, :C].multiply(scale).astype(jnp.float32)
    x_c = x.astype(compute_dtype)
    # Output projection in per-head layout (H, D, C) so head-merge + proj fuse in-kernel.
    wproj_h = wproj.astype(compute_dtype).reshape(n_heads, D, C)
    bproj_f = bproj.astype(jnp.float32)

    kernel = partial(mha_kernel, n_heads=n_heads, head_dim=D, block_b=block_b, seq_len=T)
    out = pl.pallas_call(
        kernel,
        out_shape=jax.ShapeDtypeStruct((num_blocks, block_b, 1, T * C), x.dtype),
        grid=(num_blocks,),
        in_specs=[
            pl.BlockSpec((block_b, T, C), lambda b: (b, 0, 0)),        # x batch block
            pl.BlockSpec((C, 3 * C), lambda b: (0, 0)),                # Wqkv (full, resident)
            pl.BlockSpec((1, 3 * C), lambda b: (0, 0)),                # bqkv
            pl.BlockSpec((n_heads, D, C), lambda b: (0, 0, 0)),        # Wproj per-head
            pl.BlockSpec((1, C), lambda b: (0, 0)),                    # bproj
        ],
        out_specs=pl.BlockSpec((1, block_b, 1, T * C), lambda b: (b, 0, 0, 0)),
        compiler_params=pltpu.CompilerParams(dimension_semantics=("parallel",)),
    )(x_c, wqkv_eff, bqkv_eff, wproj_h, bproj_f)
    return out.reshape(B, T, C)


def mha_reference(x, wqkv, bqkv, wproj, bproj, *, n_heads):
    """Pure-JAX reference mirroring F.scaled_dot_product_attention(is_causal=True), eval mode."""
    B, T, C = x.shape
    D = C // n_heads
    qkv = jnp.einsum('btc,cd->btd', x, wqkv) + bqkv[0]
    qkv = qkv.reshape(B, T, 3, n_heads, D).transpose(2, 0, 3, 1, 4)
    q, k, v = qkv[0], qkv[1], qkv[2]                                  # (B, H, T, D)
    s = jnp.einsum('bhqd,bhkd->bhqk', q, k) / math.sqrt(D)
    mask = jnp.tril(jnp.ones((T, T), dtype=bool))
    s = jnp.where(mask, s, -jnp.inf)
    p = jax.nn.softmax(s, axis=-1)
    ctx = jnp.einsum('bhqk,bhkd->bhqd', p, v)
    ctx = ctx.transpose(0, 2, 1, 3).reshape(B, T, C)
    return jnp.einsum('btc,cd->btd', ctx, wproj) + bproj[0]


if __name__ == "__main__":
    # config: emb_dim=32, n_heads=4, qkv_bias=True, drop_rate=0.0 (eval -> no dropout)
    B, T, C, n_heads = 4, 8, 32, 4

    key = jax.random.PRNGKey(0)
    kx, kw1, kb1, kw2, kb2 = jax.random.split(key, 5)
    x     = jax.random.normal(kx,  (B, T, C),  dtype=jnp.float32)
    wqkv  = jax.random.normal(kw1, (C, 3 * C), dtype=jnp.float32) * 0.05
    bqkv  = jax.random.normal(kb1, (1, 3 * C), dtype=jnp.float32) * 0.05
    wproj = jax.random.normal(kw2, (C, C),     dtype=jnp.float32) * 0.05
    bproj = jax.random.normal(kb2, (1, C),     dtype=jnp.float32) * 0.05

    ref = mha_reference(x, wqkv, bqkv, wproj, bproj, n_heads=n_heads)

    # f32 MXU operands (v5e-friendly path); approx-reciprocal softmax => slightly loose tol.
    out = jax.block_until_ready(mha_forward(x, wqkv, bqkv, wproj, bproj, n_heads=n_heads))
    assert out.shape == (B, T, C)
    assert jnp.allclose(out, ref, atol=2e-3, rtol=2e-3), "f32 kernel mismatch vs reference"

    # bf16 MXU operands (v6e / v7x fast path): f32 accumulation, f32 softmax.
    out_bf16 = jax.block_until_ready(
        mha_forward(x, wqkv, bqkv, wproj, bproj, n_heads=n_heads,
                    compute_dtype=jnp.bfloat16))
    assert jnp.allclose(out_bf16, ref, atol=3e-2, rtol=3e-2), "bf16 kernel mismatch vs reference"

    print("KERNEL_OK")
</pallas_src>

<mosaic_0001>
module attributes {stable_mosaic.version = 11 : i64} {
  func.func @mha_kernel(%arg0: i32, %arg1: memref<2x8x32xf32, #tpu.memory_space<vmem>>, %arg2: memref<32x96xf32, #tpu.memory_space<vmem>>, %arg3: memref<1x96xf32, #tpu.memory_space<vmem>>, %arg4: memref<4x8x32xf32, #tpu.memory_space<vmem>>, %arg5: memref<1x32xf32, #tpu.memory_space<vmem>>, %arg6: memref<1x2x1x256xf32, #tpu.memory_space<vmem>>) attributes {dimension_semantics = [#tpu.dimension_semantics<parallel>], iteration_bounds = array<i64: 2>, scalar_prefetch = 0 : i64, scratch_operands = 0 : i64, tpu.core_type = #tpu.core_type<tc>, window_params = [{transform_indices = @transform_0, window_bounds = array<i64: 2, 8, 32>}, {pipeline_mode = #tpu.pipeline_mode<synchronous>, transform_indices = @transform_1, window_bounds = array<i64: 32, 96>}, {pipeline_mode = #tpu.pipeline_mode<synchronous>, transform_indices = @transform_2, window_bounds = array<i64: 1, 96>}, {pipeline_mode = #tpu.pipeline_mode<synchronous>, transform_indices = @transform_3, window_bounds = array<i64: 4, 8, 32>}, {pipeline_mode = #tpu.pipeline_mode<synchronous>, transform_indices = @transform_4, window_bounds = array<i64: 1, 32>}, {transform_indices = @transform_5, window_bounds = array<i64: 1, 2, 1, 256>}]} {
    %c0 = arith.constant 0 : index
    %c0_0 = arith.constant 0 : index
    %c0_1 = arith.constant 0 : index
    %0 = vector.load %arg1[%c0, %c0_0, %c0_1] : memref<2x8x32xf32, #tpu.memory_space<vmem>>, vector<2x8x32xf32>
    %1 = vector.shape_cast %0 : vector<2x8x32xf32> to vector<16x32xf32>
    %c0_2 = arith.constant 0 : index
    %c0_3 = arith.constant 0 : index
    %2 = vector.load %arg2[%c0_2, %c0_3] : memref<32x96xf32, #tpu.memory_space<vmem>>, vector<32x96xf32>
    %cst = arith.constant dense<0.000000e+00> : vector<16x96xf32>
    %3 = tpu.matmul %1, %2, %cst {dimension_numbers = #tpu.dot_dimension_numbers<[1], [0], [0], [1], [0, 0, 1, 1], [], []>} : vector<16x32xf32>, vector<32x96xf32>, vector<16x96xf32> -> vector<16x96xf32>
    %c0_4 = arith.constant 0 : index
    %c0_5 = arith.constant 0 : index
    %4 = vector.load %arg3[%c0_4, %c0_5] : memref<1x96xf32, #tpu.memory_space<vmem>>, vector<1x96xf32>
    %5 = vector.shape_cast %4 : vector<1x96xf32> to vector<96xf32>
    %6 = vector.shape_cast %5 : vector<96xf32> to vector<1x96xf32>
    %7 = vector.broadcast %6 : vector<1x96xf32> to vector<16x96xf32>
    %8 = arith.addf %3, %7 : vector<16x96xf32>
    %9 = vector.extract_strided_slice %8 {offsets = [0, 0], sizes = [16, 8], strides = [1, 1]} : vector<16x96xf32> to vector<16x8xf32>
    %10 = vector.shape_cast %9 : vector<16x8xf32> to vector<2x8x8xf32>
    %11 = vector.extract_strided_slice %8 {offsets = [0, 8], sizes = [16, 8], strides = [1, 1]} : vector<16x96xf32> to vector<16x8xf32>
    %12 = vector.shape_cast %11 : vector<16x8xf32> to vector<2x8x8xf32>
    %13 = vector.extract_strided_slice %8 {offsets = [0, 16], sizes = [16, 8], strides = [1, 1]} : vector<16x96xf32> to vector<16x8xf32>
    %14 = vector.shape_cast %13 : vector<16x8xf32> to vector<2x8x8xf32>
    %15 = vector.extract_strided_slice %8 {offsets = [0, 24], sizes = [16, 8], strides = [1, 1]} : vector<16x96xf32> to vector<16x8xf32>
    %16 = vector.shape_cast %15 : vector<16x8xf32> to vector<2x8x8xf32>
    %17 = vector.shape_cast %10 : vector<2x8x8xf32> to vector<1x2x8x8xf32>
    %18 = vector.shape_cast %12 : vector<2x8x8xf32> to vector<1x2x8x8xf32>
    %19 = vector.shape_cast %14 : vector<2x8x8xf32> to vector<1x2x8x8xf32>
    %20 = vector.shape_cast %16 : vector<2x8x8xf32> to vector<1x2x8x8xf32>
    %21 = tpu.concatenate %17, %18, %19, %20 in 0 : vector<1x2x8x8xf32>, vector<1x2x8x8xf32>, vector<1x2x8x8xf32>, vector<1x2x8x8xf32> -> vector<4x2x8x8xf32>
    %22 = vector.shape_cast %21 : vector<4x2x8x8xf32> to vector<8x8x8xf32>
    %23 = vector.extract_strided_slice %8 {offsets = [0, 32], sizes = [16, 8], strides = [1, 1]} : vector<16x96xf32> to vector<16x8xf32>
    %24 = vector.shape_cast %23 : vector<16x8xf32> to vector<2x8x8xf32>
    %25 = vector.extract_strided_slice %8 {offsets = [0, 40], sizes = [16, 8], strides = [1, 1]} : vector<16x96xf32> to vector<16x8xf32>
    %26 = vector.shape_cast %25 : vector<16x8xf32> to vector<2x8x8xf32>
    %27 = vector.extract_strided_slice %8 {offsets = [0, 48], sizes = [16, 8], strides = [1, 1]} : vector<16x96xf32> to vector<16x8xf32>
    %28 = vector.shape_cast %27 : vector<16x8xf32> to vector<2x8x8xf32>
    %29 = vector.extract_strided_slice %8 {offsets = [0, 56], sizes = [16, 8], strides = [1, 1]} : vector<16x96xf32> to vector<16x8xf32>
    %30 = vector.shape_cast %29 : vector<16x8xf32> to vector<2x8x8xf32>
    %31 = vector.shape_cast %24 : vector<2x8x8xf32> to vector<1x2x8x8xf32>
    %32 = vector.shape_cast %26 : vector<2x8x8xf32> to vector<1x2x8x8xf32>
    %33 = vector.shape_cast %28 : vector<2x8x8xf32> to vector<1x2x8x8xf32>
    %34 = vector.shape_cast %30 : vector<2x8x8xf32> to vector<1x2x8x8xf32>
    %35 = tpu.concatenate %31, %32, %33, %34 in 0 : vector<1x2x8x8xf32>, vector<1x2x8x8xf32>, vector<1x2x8x8xf32>, vector<1x2x8x8xf32> -> vector<4x2x8x8xf32>
    %36 = vector.shape_cast %35 : vector<4x2x8x8xf32> to vector<8x8x8xf32>
    %37 = vector.extract_strided_slice %8 {offsets = [0, 64], sizes = [16, 8], strides = [1, 1]} : vector<16x96xf32> to vector<16x8xf32>
    %38 = vector.shape_cast %37 : vector<16x8xf32> to vector<2x8x8xf32>
    %39 = vector.extract_strided_slice %8 {offsets = [0, 72], sizes = [16, 8], strides = [1, 1]} : vector<16x96xf32> to vector<16x8xf32>
    %40 = vector.shape_cast %39 : vector<16x8xf32> to vector<2x8x8xf32>
    %41 = vector.extract_strided_slice %8 {offsets = [0, 80], sizes = [16, 8], strides = [1, 1]} : vector<16x96xf32> to vector<16x8xf32>
    %42 = vector.shape_cast %41 : vector<16x8xf32> to vector<2x8x8xf32>
    %43 = vector.extract_strided_slice %8 {offsets = [0, 88], sizes = [16, 8], strides = [1, 1]} : vector<16x96xf32> to vector<16x8xf32>
    %44 = vector.shape_cast %43 : vector<16x8xf32> to vector<2x8x8xf32>
    %45 = vector.shape_cast %38 : vector<2x8x8xf32> to vector<1x2x8x8xf32>
    %46 = vector.shape_cast %40 : vector<2x8x8xf32> to vector<1x2x8x8xf32>
    %47 = vector.shape_cast %42 : vector<2x8x8xf32> to vector<1x2x8x8xf32>
    %48 = vector.shape_cast %44 : vector<2x8x8xf32> to vector<1x2x8x8xf32>
    %49 = tpu.concatenate %45, %46, %47, %48 in 0 : vector<1x2x8x8xf32>, vector<1x2x8x8xf32>, vector<1x2x8x8xf32>, vector<1x2x8x8xf32> -> vector<4x2x8x8xf32>
    %50 = vector.shape_cast %49 : vector<4x2x8x8xf32> to vector<8x8x8xf32>
    "tpu.trace_start"() <{level = 10 : i32, message = "ntd,nsd->nts"}> : () -> ()
    %cst_6 = arith.constant dense<0.000000e+00> : vector<8x8x8xf32>
    %51 = tpu.matmul %22, %36, %cst_6 {dimension_numbers = #tpu.dot_dimension_numbers<[2], [2], [1], [1], [0, 0, 0, 1, 1, 1], [0], [0]>} : vector<8x8x8xf32>, vector<8x8x8xf32>, vector<8x8x8xf32> -> vector<8x8x8xf32>
    "tpu.trace_stop"() : () -> ()
    %52 = tpu.iota {dimensions = array<i32: 0>} : vector<8x8xi32>
    %53 = tpu.iota {dimensions = array<i32: 1>} : vector<8x8xi32>
    %54 = arith.cmpi sge, %52, %53 : vector<8x8xi32>
    %55 = vector.shape_cast %54 : vector<8x8xi1> to vector<1x8x8xi1>
    %cst_7 = arith.constant -1.000000e+30 : f32
    %56 = vector.shape_cast %55 : vector<1x8x8xi1> to vector<1x8x8xi1>
    %57 = vector.broadcast %56 : vector<1x8x8xi1> to vector<8x8x8xi1>
    %58 = vector.broadcast %cst_7 : f32 to vector<8x8x8xf32>
    %59 = arith.select %57, %51, %58 : vector<8x8x8xi1>, vector<8x8x8xf32>
    %cst_8 = arith.constant dense<0xFF800000> : vector<8x8xf32>
    %60 = vector.multi_reduction <maximumf>, %59, %cst_8 [2] : vector<8x8x8xf32> to vector<8x8xf32>
    %61 = vector.shape_cast %60 : vector<8x8xf32> to vector<8x8x1xf32>
    %62 = vector.broadcast %61 : vector<8x8x1xf32> to vector<8x8x8xf32>
    %63 = arith.subf %59, %62 : vector<8x8x8xf32>
    %64 = math.exp %63 : vector<8x8x8xf32>
    %cst_9 = arith.constant dense<0.000000e+00> : vector<8x8xf32>
    %65 = vector.multi_reduction <add>, %64, %cst_9 [2] : vector<8x8x8xf32> to vector<8x8xf32>
    %66 = vector.shape_cast %65 : vector<8x8xf32> to vector<8x8x1xf32>
    %67 = tpu.reciprocal %66 {approx = true} : vector<8x8x1xf32> -> vector<8x8x1xf32>
    %68 = vector.broadcast %67 : vector<8x8x1xf32> to vector<8x8x8xf32>
    %69 = arith.mulf %64, %68 : vector<8x8x8xf32>
    "tpu.trace_start"() <{level = 10 : i32, message = "nts,nsd->ntd"}> : () -> ()
    %cst_10 = arith.constant dense<0.000000e+00> : vector<8x8x8xf32>
    %70 = tpu.matmul %69, %50, %cst_10 {dimension_numbers = #tpu.dot_dimension_numbers<[2], [1], [1], [2], [0, 0, 0, 1, 1, 2], [0], [0]>} : vector<8x8x8xf32>, vector<8x8x8xf32>, vector<8x8x8xf32> -> vector<8x8x8xf32>
    "tpu.trace_stop"() : () -> ()
    %71 = vector.shape_cast %70 : vector<8x8x8xf32> to vector<4x16x8xf32>
    %c0_11 = arith.constant 0 : index
    %c0_12 = arith.constant 0 : index
    %c0_13 = arith.constant 0 : index
    %72 = vector.load %arg4[%c0_11, %c0_12, %c0_13] : memref<4x8x32xf32, #tpu.memory_space<vmem>>, vector<4x8x32xf32>
    "tpu.trace_start"() <{level = 10 : i32, message = "hnd,hdc->hnc"}> : () -> ()
    %cst_14 = arith.constant dense<0.000000e+00> : vector<4x16x32xf32>
    %73 = tpu.matmul %71, %72, %cst_14 {dimension_numbers = #tpu.dot_dimension_numbers<[2], [1], [1], [2], [0, 0, 0, 1, 1, 2], [0], [0]>} : vector<4x16x8xf32>, vector<4x8x32xf32>, vector<4x16x32xf32> -> vector<4x16x32xf32>
    "tpu.trace_stop"() : () -> ()
    %cst_15 = arith.constant dense<0.000000e+00> : vector<16x32xf32>
    %74 = vector.multi_reduction <add>, %73, %cst_15 [0] : vector<4x16x32xf32> to vector<16x32xf32>
    %c0_16 = arith.constant 0 : index
    %c0_17 = arith.constant 0 : index
    %75 = vector.load %arg5[%c0_16, %c0_17] : memref<1x32xf32, #tpu.memory_space<vmem>>, vector<1x32xf32>
    %76 = vector.shape_cast %75 : vector<1x32xf32> to vector<32xf32>
    %77 = vector.shape_cast %76 : vector<32xf32> to vector<1x32xf32>
    %78 = vector.broadcast %77 : vector<1x32xf32> to vector<16x32xf32>
    %79 = arith.addf %74, %78 : vector<16x32xf32>
    %80 = vector.shape_cast %79 : vector<16x32xf32> to vector<2x8x32xf32>
    %81 = vector.extract_strided_slice %80 {offsets = [0, 0, 0], sizes = [2, 1, 32], strides = [1, 1, 1]} : vector<2x8x32xf32> to vector<2x1x32xf32>
    %82 = vector.extract_strided_slice %80 {offsets = [0, 1, 0], sizes = [2, 1, 32], strides = [1, 1, 1]} : vector<2x8x32xf32> to vector<2x1x32xf32>
    %83 = vector.extract_strided_slice %80 {offsets = [0, 2, 0], sizes = [2, 1, 32], strides = [1, 1, 1]} : vector<2x8x32xf32> to vector<2x1x32xf32>
    %84 = vector.extract_strided_slice %80 {offsets = [0, 3, 0], sizes = [2, 1, 32], strides = [1, 1, 1]} : vector<2x8x32xf32> to vector<2x1x32xf32>
    %85 = vector.extract_strided_slice %80 {offsets = [0, 4, 0], sizes = [2, 1, 32], strides = [1, 1, 1]} : vector<2x8x32xf32> to vector<2x1x32xf32>
    %86 = vector.extract_strided_slice %80 {offsets = [0, 5, 0], sizes = [2, 1, 32], strides = [1, 1, 1]} : vector<2x8x32xf32> to vector<2x1x32xf32>
    %87 = vector.extract_strided_slice %80 {offsets = [0, 6, 0], sizes = [2, 1, 32], strides = [1, 1, 1]} : vector<2x8x32xf32> to vector<2x1x32xf32>
    %88 = vector.extract_strided_slice %80 {offsets = [0, 7, 0], sizes = [2, 1, 32], strides = [1, 1, 1]} : vector<2x8x32xf32> to vector<2x1x32xf32>
    %89 = tpu.concatenate %81, %82, %83, %84, %85, %86, %87, %88 in 2 : vector<2x1x32xf32>, vector<2x1x32xf32>, vector<2x1x32xf32>, vector<2x1x32xf32>, vector<2x1x32xf32>, vector<2x1x32xf32>, vector<2x1x32xf32>, vector<2x1x32xf32> -> vector<2x1x256xf32>
    %c0_18 = arith.constant 0 : index
    %c0_19 = arith.constant 0 : index
    %c0_20 = arith.constant 0 : index
    %c0_21 = arith.constant 0 : index
    %90 = vector.load %arg6[%c0_18, %c0_19, %c0_20, %c0_21] : memref<1x2x1x256xf32, #tpu.memory_space<vmem>>, vector<1x2x1x256xf32>
    %91 = vector.shape_cast %90 : vector<1x2x1x256xf32> to vector<2x1x256xf32>
    %92 = vector.shape_cast %89 : vector<2x1x256xf32> to vector<1x2x1x256xf32>
    tpu.vector_store %arg6[%c0_18, %c0_19, %c0_20, %c0_21], %92 {strides = array<i32>} : memref<1x2x1x256xf32, #tpu.memory_space<vmem>>, vector<1x2x1x256xf32>,
    return
  }
  func.func @transform_0(%arg0: i32) -> (i32, i32, i32) {
    %c0_i32 = arith.constant 0 : i32
    %c0_i32_0 = arith.constant 0 : i32
    %c0_i32_1 = arith.constant 0 : i32
    return %arg0, %c0_i32, %c0_i32_0 : i32, i32, i32
  }
  func.func @transform_1(%arg0: i32) -> (i32, i32) {
    %c0_i32 = arith.constant 0 : i32
    %c0_i32_0 = arith.constant 0 : i32
    %c0_i32_1 = arith.constant 0 : i32
    return %c0_i32, %c0_i32_0 : i32, i32
  }
  func.func @transform_2(%arg0: i32) -> (i32, i32) {
    %c0_i32 = arith.constant 0 : i32
    %c0_i32_0 = arith.constant 0 : i32
    %c0_i32_1 = arith.constant 0 : i32
    return %c0_i32, %c0_i32_0 : i32, i32
  }
  func.func @transform_3(%arg0: i32) -> (i32, i32, i32) {
    %c0_i32 = arith.constant 0 : i32
    %c0_i32_0 = arith.constant 0 : i32
    %c0_i32_1 = arith.constant 0 : i32
    %c0_i32_2 = arith.constant 0 : i32
    return %c0_i32, %c0_i32_0, %c0_i32_1 : i32, i32, i32
  }
  func.func @transform_4(%arg0: i32) -> (i32, i32) {
    %c0_i32 = arith.constant 0 : i32
    %c0_i32_0 = arith.constant 0 : i32
    %c0_i32_1 = arith.constant 0 : i32
    return %c0_i32, %c0_i32_0 : i32, i32
  }
  func.func @transform_5(%arg0: i32) -> (i32, i32, i32, i32) {
    %c0_i32 = arith.constant 0 : i32
    %c0_i32_0 = arith.constant 0 : i32
    %c0_i32_1 = arith.constant 0 : i32
    %c0_i32_2 = arith.constant 0 : i32
    return %arg0, %c0_i32, %c0_i32_0, %c0_i32_1 : i32, i32, i32, i32
  }
}

</mosaic_0001>

<llo_original>
// kernel: tpu_custom_call.1
$region0: #{tpu_custom_call.1}
  #allocation0 [shape = 'u32[]', space=smem, size = 0x4, offset = 0x4, fixed_abs, tag = 'smem constant byte address 0x4 - core index']
  #allocation1 [shape = 'u32[144,128]{1,0:T(1,128)}', space=vmem, size = 0x12000, scoped, tag = 'internal scratch']
  %s0 = inlined_call_operand.hbm [shape: f32[4,8,32], index: 0, kind: input, shape index: {}]
  %s1 = inlined_call_operand.hbm [shape: f32[32,96], index: 1, kind: input, shape index: {}]
  %s2 = inlined_call_operand.vmem [shape: f32[1,96], index: 2, kind: input, shape index: {}]
  %s3 = inlined_call_operand.hbm [shape: f32[4,8,32], index: 3, kind: input, shape index: {}]
  %s4 = inlined_call_operand.vmem [shape: f32[1,32], index: 4, kind: input, shape index: {}]
  %s5 = inlined_call_operand.hbm [shape: f32[2,2,1,256], index: 5, kind: output, shape index: {}]
  %s6 = sld [smem:[#allocation0]]
  $region65: #{tpu_custom_call.1} parent=0
    _
  %s8 = ssub.s32 1, %s6
  %s9 = scalar_select 0, %s8, %s6
  $region1: #{tpu_custom_call.1} parent=0
    #allocation2 [shape = 'u8[16384]{0}', space=vmem, size = 0x4000, scoped, tag = 'input window, operand 0']
    #allocation3 [shape = 's32[2]{0}', space=sflag, size = 0x8, scoped, tag = 'scoped memory for tpu_custom_call.1']
    #allocation4 [shape = 's32[2]{0}', space=sflag, size = 0x8, scoped, tag = 'scoped memory for tpu_custom_call.1']
    #allocation5 [shape = 'u8[16384]{0}', space=vmem, size = 0x4000, scoped, tag = 'input window, operand 1, single buffered']
    #allocation6 [shape = 's32[1]{0}', space=sflag, size = 0x4, scoped, tag = 'scoped memory for tpu_custom_call.1']
    #allocation7 [shape = 'u8[16384]{0}', space=vmem, size = 0x4000, scoped, tag = 'input window, operand 3, single buffered']
    #allocation8 [shape = 'u8[4096]{0}', space=vmem, size = 0x1000, scoped, tag = 'output window, operand 0']
    %10 = vsyncpa [#allocation3], 0
    %s11 = scalar_lea.sflag [#allocation3], 1
    %12 = vsyncpa %s11, 0
    %13 = vsyncpa [#allocation6], 0
    %14 = vsyncpa [#allocation4], 0
    %s15 = scalar_lea.sflag [#allocation4], 1
    %16 = vsyncpa %s15, 0
    loop: start=0, step=1, limit=4
    $region2: #{tpu_custom_call.1} parent=1 // loop_pre_header
      _
    $region3: #{tpu_custom_call.1} parent=1 // loop_header
      %s18 = sphi 0, %s22
      %p19 = scmp.ge.s32.totalorder %s18, 4
      %s28 = sphi 0, %s30
      %s31 = sphi 0, %s28
      %s32 = sphi 0, %s31
      %s48 = sphi 0, %s32
      %s52 = sphi 0, %s52
      %s54 = sphi 0, %s52
      %s55 = sphi 0, %s54
      %s69 = sphi 0, %s55
      %s73 = sphi 0, %s73
      %s75 = sphi 0, %s73
      %s76 = sphi 0, %s75
      %s90 = sphi 0, %s76
      %s94 = sphi 0, %s94
      %s96 = sphi 0, %s94
      %s97 = sphi 0, %s96
      %s111 = sphi 0, %s97
      %s115 = sphi 0, %s115
      %s117 = sphi 0, %s115
      %s118 = sphi 0, %s117
      %s132 = sphi 0, %s118
      %s138 = sphi 0, %s140
      %s141 = sphi 0, %s138
      %s142 = sphi 0, %s141
      %s158 = sphi 0, %s142
    $region4: #{tpu_custom_call.1} parent=1 // loop_header_branch
      %21 = sbr.rel (%p19) target = $region8
    $region5: #{tpu_custom_call.1} parent=1 // loop_body
      %s23 = ssub.s32 %s18, 1
      %s24 = ssub.s32 %s18, 2
      %s25 = sadd.s32 %s18, 1
      %s26 = ssub.s32 %s18, %s25
      %p27 = scmp.eq.s32.totalorder %s26, 0
      %s29 = sadd.s32 %s28, 1
      %s30 = scalar_select %p27, %s28, %s29
      %p33 = pneg %p27
      %p34 = scmp.eq.s32.totalorder %s18, 1
      %p35 = por %p33, %p34
      %p36 = scmp.ne.s32.totalorder %s28, %s31
      %p37 = scmp.eq.s32.totalorder %s18, 0
      %p38 = por %p36, %p37
      %p39 = scmp.ne.s32.totalorder %s28, %s31
      %p40 = scmp.eq.s32.totalorder %s23, 1
      %p41 = por %p39, %p40
      %p42 = scmp.ne.s32.totalorder %s31, %s32
      %p43 = scmp.eq.s32.totalorder %s23, 0
      %p44 = por %p42, %p43
      %p45 = scmp.ne.s32.totalorder %s31, %s32
      %p46 = scmp.eq.s32.totalorder %s24, 1
      %p47 = por %p45, %p46
      %p49 = scmp.ne.s32.totalorder %s32, %s48
      %p50 = scmp.eq.s32.totalorder %s24, 0
      %p51 = por %p49, %p50
      %s53 = sadd.s32 %s52, 1
      %p56 = scmp.eq.s32.totalorder %s18, 1
      %p57 = scmp.ne.s32.totalorder %s52, %s54
      %p58 = scmp.eq.s32.totalorder %s18, 0
      %p59 = por %p57, %p58
      %p60 = scmp.ne.s32.totalorder %s52, %s54
      %p61 = scmp.eq.s32.totalorder %s23, 1
      %p62 = por %p60, %p61
      %p63 = scmp.ne.s32.totalorder %s54, %s55
      %p64 = scmp.eq.s32.totalorder %s23, 0
      %p65 = por %p63, %p64
      %p66 = scmp.ne.s32.totalorder %s54, %s55
      %p67 = scmp.eq.s32.totalorder %s24, 1
      %p68 = por %p66, %p67
      %p70 = scmp.ne.s32.totalorder %s55, %s69
      %p71 = scmp.eq.s32.totalorder %s24, 0
      %p72 = por %p70, %p71
      %s74 = sadd.s32 %s73, 1
      %p77 = scmp.eq.s32.totalorder %s18, 1
      %p78 = scmp.ne.s32.totalorder %s73, %s75
      %p79 = scmp.eq.s32.totalorder %s18, 0
      %p80 = por %p78, %p79
      %p81 = scmp.ne.s32.totalorder %s73, %s75
      %p82 = scmp.eq.s32.totalorder %s23, 1
      %p83 = por %p81, %p82
      %p84 = scmp.ne.s32.totalorder %s75, %s76
      %p85 = scmp.eq.s32.totalorder %s23, 0
      %p86 = por %p84, %p85
      %p87 = scmp.ne.s32.totalorder %s75, %s76
      %p88 = scmp.eq.s32.totalorder %s24, 1
      %p89 = por %p87, %p88
      %p91 = scmp.ne.s32.totalorder %s76, %s90
      %p92 = scmp.eq.s32.totalorder %s24, 0
      %p93 = por %p91, %p92
      %s95 = sadd.s32 %s94, 1
      %p98 = scmp.eq.s32.totalorder %s18, 1
      %p99 = scmp.ne.s32.totalorder %s94, %s96
      %p100 = scmp.eq.s32.totalorder %s18, 0
      %p101 = por %p99, %p100
      %p102 = scmp.ne.s32.totalorder %s94, %s96
      %p103 = scmp.eq.s32.totalorder %s23, 1
      %p104 = por %p102, %p103
      %p105 = scmp.ne.s32.totalorder %s96, %s97
      %p106 = scmp.eq.s32.totalorder %s23, 0
      %p107 = por %p105, %p106
      %p108 = scmp.ne.s32.totalorder %s96, %s97
      %p109 = scmp.eq.s32.totalorder %s24, 1
      %p110 = por %p108, %p109
      %p112 = scmp.ne.s32.totalorder %s97, %s111
      %p113 = scmp.eq.s32.totalorder %s24, 0
      %p114 = por %p112, %p113
      %s116 = sadd.s32 %s115, 1
      %p119 = scmp.eq.s32.totalorder %s18, 1
      %p120 = scmp.ne.s32.totalorder %s115, %s117
      %p121 = scmp.eq.s32.totalorder %s18, 0
      %p122 = por %p120, %p121
      %p123 = scmp.ne.s32.totalorder %s115, %s117
      %p124 = scmp.eq.s32.totalorder %s23, 1
      %p125 = por %p123, %p124
      %p126 = scmp.ne.s32.totalorder %s117, %s118
      %p127 = scmp.eq.s32.totalorder %s23, 0
      %p128 = por %p126, %p127
      %p129 = scmp.ne.s32.totalorder %s117, %s118
      %p130 = scmp.eq.s32.totalorder %s24, 1
      %p131 = por %p129, %p130
      %p133 = scmp.ne.s32.totalorder %s118, %s132
      %p134 = scmp.eq.s32.totalorder %s24, 0
      %p135 = por %p133, %p134
      %s136 = ssub.s32 %s18, %s25
      %p137 = scmp.eq.s32.totalorder %s136, 0
      %s139 = sadd.s32 %s138, 1
      %s140 = scalar_select %p137, %s138, %s139
      %p143 = pneg %p137
      %p144 = scmp.eq.s32.totalorder %s18, 1
      %p145 = por %p143, %p144
      %p146 = scmp.ne.s32.totalorder %s138, %s141
      %p147 = scmp.eq.s32.totalorder %s18, 0
      %p148 = por %p146, %p147
      %p149 = scmp.ne.s32.totalorder %s138, %s141
      %p150 = scmp.eq.s32.totalorder %s23, 1
      %p151 = por %p149, %p150
      %p152 = scmp.ne.s32.totalorder %s141, %s142
      %p153 = scmp.eq.s32.totalorder %s23, 0
      %p154 = por %p152, %p153
      %p155 = scmp.ne.s32.totalorder %s141, %s142
      %p156 = scmp.eq.s32.totalorder %s24, 1
      %p157 = por %p155, %p156
      %p159 = scmp.ne.s32.totalorder %s142, %s158
      %p160 = scmp.eq.s32.totalorder %s24, 0
      %p161 = por %p159, %p160
      %p162 = scmp.le.s32.totalorder 1, %s18
      %p163 = scmp.lt.s32.totalorder %s18, 3
      %p164 = pnand %p162, %p163
      %p165 = pneg %p164
      // Predicated region
      $region9: #{tpu_custom_call.1} parent=5 // pred_check
        _
      $region10: #{tpu_custom_call.1} parent=5 // pred_check_branch
        %167 = sbr.rel (%p164) target = $region12
      $region11: #{tpu_custom_call.1} parent=5 // pred_region
        %s168 = ssub.s32 %s18, 1
        // Predicated region
        $region13: #{tpu_custom_call.1} parent=11 // pred_check
          %p169 = pneg %p65
        $region14: #{tpu_custom_call.1} parent=11 // pred_check_branch
          %171 = sbr.rel (%p169) target = $region16
        $region15: #{tpu_custom_call.1} parent=11 // pred_region
          %s173 = ssub.s32 512, 512
          %174 = vsyncadd [#allocation6], %s173
          %s175 = sshll.u32 [#allocation5], 4
          %s176 = int_to_ptr.vmem [resolvable:$true] %s175
          %181 = dma.hbm_to_vmem [thread:$0]  %s1, 512, %s176, [#allocation6], 128, 128, 8
        $region16: #{tpu_custom_call.1} parent=11 // pred_fallthru
          _
        // Predicated region
        $region17: #{tpu_custom_call.1} parent=11 // pred_check
          %p182 = pneg %p86
        $region18: #{tpu_custom_call.1} parent=11 // pred_check_branch
          %184 = sbr.rel (%p182) target = $region20
        $region19: #{tpu_custom_call.1} parent=11 // pred_region
          _
        $region20: #{tpu_custom_call.1} parent=11 // pred_fallthru
          _
        // Predicated region
        $region21: #{tpu_custom_call.1} parent=11 // pred_check
          %p185 = pneg %p107
        $region22: #{tpu_custom_call.1} parent=11 // pred_check_branch
          %187 = sbr.rel (%p185) target = $region24
        $region23: #{tpu_custom_call.1} parent=11 // pred_region
          %s189 = ssub.s32 512, 512
          %190 = vsyncadd [#allocation6], %s189
          %s191 = sshll.u32 [#allocation7], 4
          %s192 = int_to_ptr.vmem [resolvable:$true] %s191
          %197 = dma.hbm_to_vmem [thread:$0]  %s3, 512, %s192, [#allocation6], 128, 128, 8
        $region24: #{tpu_custom_call.1} parent=11 // pred_fallthru
          _
        // Predicated region
        $region25: #{tpu_custom_call.1} parent=11 // pred_check
          %p198 = pneg %p128
        $region26: #{tpu_custom_call.1} parent=11 // pred_check_branch
          %200 = sbr.rel (%p198) target = $region28
        $region27: #{tpu_custom_call.1} parent=11 // pred_region
          _
        $region28: #{tpu_custom_call.1} parent=11 // pred_fallthru
          _
      $region12: #{tpu_custom_call.1} parent=5 // pred_fallthru
        _
      %p201 = scmp.lt.s32.totalorder %s18, 2
      // Predicated region
      $region29: #{tpu_custom_call.1} parent=5 // pred_check
        %p202 = pneg %p201
      $region30: #{tpu_custom_call.1} parent=5 // pred_check_branch
        %204 = sbr.rel (%p202) target = $region32
      $region31: #{tpu_custom_call.1} parent=5 // pred_region
        // Predicated region
        $region33: #{tpu_custom_call.1} parent=31 // pred_check
          %p205 = pneg %p38
        $region34: #{tpu_custom_call.1} parent=31 // pred_check_branch
          %207 = sbr.rel (%p205) target = $region36
        $region35: #{tpu_custom_call.1} parent=31 // pred_region
          %s208 = sand.u32 %s28, 1
          %s209 = scalar_lea.sflag [#allocation3], %s208
          %s210 = sand.u32 %s28, 1
          %s211 = smul.addr %s210, 16
          %s212 = scalar_lea.vmem [#allocation2], %s211
          %s213 = smul.u32 2, %s18
          %s215 = ssub.s32 256, 256
          %216 = vsyncadd %s209, %s215
          %s217 = smul.addr %s213, 128
          %s218 = scalar_lea.hbm %s0, %s217
          %s219 = sshll.u32 %s212, 4
          %s220 = int_to_ptr.vmem [resolvable:$true] %s219
          %225 = dma.hbm_to_vmem [thread:$0]  %s218, 256, %s220, %s209, 128, 128, 8
        $region36: #{tpu_custom_call.1} parent=31 // pred_fallthru
          _
      $region32: #{tpu_custom_call.1} parent=5 // pred_fallthru
        _
      %p226 = scmp.le.s32.totalorder 1, %s18
      %p227 = scmp.lt.s32.totalorder %s18, 3
      %p228 = pnand %p226, %p227
      %p229 = pneg %p228
      // Predicated region
      $region37: #{tpu_custom_call.1} parent=5 // pred_check
        _
      $region38: #{tpu_custom_call.1} parent=5 // pred_check_branch
        %231 = sbr.rel (%p228) target = $region40
      $region39: #{tpu_custom_call.1} parent=5 // pred_region
        %s232 = ssub.s32 %s18, 1
        %s233 = sand.u32 %s31, 1
        %s234 = scalar_lea.sflag [#allocation3], %s233
        %s235 = sand.u32 %s31, 1
        %s236 = smul.addr %s235, 16
        %s237 = scalar_lea.vmem [#allocation2], %s236
        // Predicated region
        $region41: #{tpu_custom_call.1} parent=39 // pred_check
          %p238 = pneg %p44
        $region42: #{tpu_custom_call.1} parent=39 // pred_check_branch
          %240 = sbr.rel (%p238) target = $region44
        $region43: #{tpu_custom_call.1} parent=39 // pred_region
          %241 = dma.done %s234, 256
        $region44: #{tpu_custom_call.1} parent=39 // pred_fallthru
          _
        // Predicated region
        $region45: #{tpu_custom_call.1} parent=39 // pred_check
          %p242 = pneg %p65
        $region46: #{tpu_custom_call.1} parent=39 // pred_check_branch
          %244 = sbr.rel (%p242) target = $region48
        $region47: #{tpu_custom_call.1} parent=39 // pred_region
          %245 = dma.done [#allocation6], 512
        $region48: #{tpu_custom_call.1} parent=39 // pred_fallthru
          _
        // Predicated region
        $region49: #{tpu_custom_call.1} parent=39 // pred_check
          %p246 = pneg %p107
        $region50: #{tpu_custom_call.1} parent=39 // pred_check_branch
          %248 = sbr.rel (%p246) target = $region52
        $region51: #{tpu_custom_call.1} parent=39 // pred_region
          %249 = dma.done [#allocation6], 512
        $region52: #{tpu_custom_call.1} parent=39 // pred_fallthru
          _
        %s250 = sand.u32 %s31, 1
        %s251 = scalar_lea.sflag [#allocation3], %s250
        %s252 = sand.u32 %s31, 1
        %s253 = smul.addr %s252, 16
        %s254 = scalar_lea.vmem [#allocation2], %s253
        %p255 = pneg %p44
        %p256 = pneg %p41
        %p257 = pneg %p65
        %p258 = pneg %p62
        %p259 = pneg %p86
        %p260 = pneg %p83
        %p261 = pneg %p107
        %p262 = pneg %p104
        %p263 = pneg %p128
        %p264 = pneg %p125
        %p265 = pneg %p154
        %p266 = pneg %p151
        %s267 = sand.u32 %s141, 1
        %s268 = scalar_lea.sflag [#allocation4], %s267
        %s269 = sand.u32 %s141, 1
        %s270 = smul.addr %s269, 4
        %s271 = scalar_lea.vmem [#allocation8], %s270
        %s272 = smul.u32 2, %s23
        %v273 = vld [vmem:[%s237] sm:$0xff]
        %v274 = vld [vmem:[%s237 + $0x8] sm:$0xff]
        %v275 = vld [vmem:[#allocation5] sm:$0xff]
        %v276 = vld [vmem:[#allocation5 + $0x8] sm:$0xff]
        %v277 = vld [vmem:[#allocation5 + $0x10] sm:$0xff]
        %v278 = vld [vmem:[#allocation5 + $0x18] sm:$0xff]
        %v279 = vld [vmem:[%s2] sm:$0x1]
        %v281 = vlaneseq
        %v282 = vshrl.u32 %v281, 7
        %v283 = vsub.s32 0, %v282
        %v284 = vrot.slane %v279, %v283
        %vm286 = vcmask 261120
        %v288 = vsel %vm286, %v273, 0
        %v291 = vsel %vm286, %v274, 0
        %293 = vmatprep.subr.mxu0 0.0
        %294 = vmatpush1.msra.mxu0 0.0
        %295 = vmatprep.subr.mxu0 0.0
        %296 = vmatpush1.msra.mxu0 0.0
        %297 = vmatprep.subr.mxu0 0.0
        %298 = vmatpush1.msra.mxu0 0.0
        %299 = vmatprep.subr.mxu0 0.0
        %300 = vmatpush1.msra.mxu0 0.0
        %301 = vmatprep.subr.mxu0 0.0
        %302 = vmatpush1.msra.mxu0 0.0
        %303 = vmatprep.subr.mxu0 0.0
        %304 = vmatpush1.msra.mxu0 0.0
        %305 = vmatprep.subr.mxu0 0.0
        %306 = vmatpush1.msra.mxu0 0.0
        %307 = vmatprep.subr.mxu0 0.0
        %308 = vmatpush1.msra.mxu0 0.0
        %309 = vmatprep.subr.mxu0 0.0
        %310 = vmatpush1.msra.mxu0 0.0
        %311 = vmatprep.subr.mxu0 0.0
        %312 = vmatpush1.msra.mxu0 0.0
        %313 = vmatprep.subr.mxu0 0.0
        %314 = vmatpush1.msra.mxu0 0.0
        %315 = vmatprep.subr.mxu0 0.0
        %316 = vmatpush1.msra.mxu0 0.0
        %317 = vmatprep.subr.mxu0 0.0
        %318 = vmatpush1.msra.mxu0 %v278
        %319 = vmatprep.subr.mxu0 0.0
        %320 = vmatpush1.msra.mxu0 %v277
        %321 = vmatprep.subr.mxu0 0.0
        %322 = vmatpush1.msra.mxu0 %v276
        %323 = vmatprep.subr.mxu0 0.0
        %324 = vmatpush1.msra.mxu0 %v275
        %325 = vmatprep.subr.mxu0 0.0
        %326 = vmatpush2.msra.mxu0 0.0
        %327 = vmatprep.subr.mxu0 0.0
        %328 = vmatpush2.msra.mxu0 0.0
        %329 = vmatprep.subr.mxu0 0.0
        %330 = vmatpush2.msra.mxu0 0.0
        %331 = vmatprep.subr.mxu0 0.0
        %332 = vmatpush2.msra.mxu0 0.0
        %333 = vmatprep.subr.mxu0 0.0
        %334 = vmatpush2.msra.mxu0 0.0
        %335 = vmatprep.subr.mxu0 0.0
        %336 = vmatpush2.msra.mxu0 0.0
        %337 = vmatprep.subr.mxu0 0.0
        %338 = vmatpush2.msra.mxu0 0.0
        %339 = vmatprep.subr.mxu0 0.0
        %340 = vmatpush2.msra.mxu0 0.0
        %341 = vmatprep.subr.mxu0 0.0
        %342 = vmatpush2.msra.mxu0 0.0
        %343 = vmatprep.subr.mxu0 0.0
        %344 = vmatpush2.msra.mxu0 0.0
        %345 = vmatprep.subr.mxu0 0.0
        %346 = vmatpush2.msra.mxu0 0.0
        %347 = vmatprep.subr.mxu0 0.0
        %348 = vmatpush2.msra.mxu0 0.0
        %349 = vmatprep.subr.mxu0 0.0
        %350 = vmatpush2.msra.mxu0 0.0
        %351 = vmatprep.subr.mxu0 0.0
        %352 = vmatpush2.msra.mxu0 0.0
        %353 = vmatprep.subr.mxu0 0.0
        %354 = vmatpush2.msra.mxu0 0.0
        %355 = vmatprep.subr.mxu0 0.0
        %356 = vmatpush2.msra.mxu0 0.0
        %357 = vmatprep.mubr.f32.mxu0 0.0
        %358 = vmatmul.mubr.f32.gmra.mxu0 %v288
        %v359 = vpop.f32.mrf.mxu0
        %v360 = vadd.f32 %v284, %v359
        %v361 = vpop.f32.mrf.mxu0
        %362 = vmatprep.mubr.f32.mxu0 0.0
        %363 = vmatmul.mubr.f32.gmra.mxu0 %v291
        %v364 = vpop.f32.mrf.mxu0
        %v365 = vadd.f32 %v284, %v364
        %v366 = vpop.f32.mrf.mxu0
        %367 = vdwg.mxu0
        %370 = vrot.lane.b32.xlu0 %v360, 120
        %v371 = vpop.permute.xlu0 %370
        %372 = vrot.lane.b32.xlu0 %v365, 120
        %v373 = vpop.permute.xlu0 %372
        %374 = vrot.lane.b32.xlu0 %v360, 112
        %v375 = vpop.permute.xlu0 %374
        %376 = vrot.lane.b32.xlu0 %v365, 112
        %v377 = vpop.permute.xlu0 %376
        %378 = vrot.lane.b32.xlu0 %v360, 104
        %v379 = vpop.permute.xlu0 %378
        %380 = vrot.lane.b32.xlu0 %v365, 104
        %v381 = vpop.permute.xlu0 %380
        %382 = vrot.lane.b32.xlu0 %v360, 96
        %v383 = vpop.permute.xlu0 %382
        %vm384 = vcmask 64512
        %v385 = vsel %vm384, %v360, 0
        %v387 = vsel %vm384, %v383, 0
        %389 = vmatprep.subr.mxu0 0.0
        %390 = vmatpush1.xpose.msra.mxu0 0.0
        %391 = vmatprep.subr.mxu0 0.0
        %392 = vmatpush1.xpose.msra.mxu0 0.0
        %393 = vmatprep.subr.mxu0 0.0
        %394 = vmatpush1.xpose.msra.mxu0 0.0
        %395 = vmatprep.subr.mxu0 0.0
        %396 = vmatpush1.xpose.msra.mxu0 0.0
        %397 = vmatprep.subr.mxu0 0.0
        %398 = vmatpush1.xpose.msra.mxu0 0.0
        %399 = vmatprep.subr.mxu0 0.0
        %400 = vmatpush1.xpose.msra.mxu0 0.0
        %401 = vmatprep.subr.mxu0 0.0
        %402 = vmatpush1.xpose.msra.mxu0 0.0
        %403 = vmatprep.subr.mxu0 0.0
        %404 = vmatpush1.xpose.msra.mxu0 0.0
        %405 = vmatprep.subr.mxu0 0.0
        %406 = vmatpush1.xpose.msra.mxu0 0.0
        %407 = vmatprep.subr.mxu0 0.0
        %408 = vmatpush1.xpose.msra.mxu0 0.0
        %409 = vmatprep.subr.mxu0 0.0
        %410 = vmatpush1.xpose.msra.mxu0 0.0
        %411 = vmatprep.subr.mxu0 0.0
        %412 = vmatpush1.xpose.msra.mxu0 0.0
        %413 = vmatprep.subr.mxu0 0.0
        %414 = vmatpush1.xpose.msra.mxu0 0.0
        %415 = vmatprep.subr.mxu0 0.0
        %416 = vmatpush1.xpose.msra.mxu0 0.0
        %417 = vmatprep.subr.mxu0 0.0
        %418 = vmatpush1.xpose.msra.mxu0 0.0
        %419 = vmatprep.subr.mxu0 0.0
        %420 = vmatpush1.xpose.msra.mxu0 %v387
        %421 = vmatprep.subr.mxu0 0.0
        %422 = vmatpush2.xpose.msra.mxu0 0.0
        %423 = vmatprep.subr.mxu0 0.0
        %424 = vmatpush2.xpose.msra.mxu0 0.0
        %425 = vmatprep.subr.mxu0 0.0
        %426 = vmatpush2.xpose.msra.mxu0 0.0
        %427 = vmatprep.subr.mxu0 0.0
        %428 = vmatpush2.xpose.msra.mxu0 0.0
        %429 = vmatprep.subr.mxu0 0.0
        %430 = vmatpush2.xpose.msra.mxu0 0.0
        %431 = vmatprep.subr.mxu0 0.0
        %432 = vmatpush2.xpose.msra.mxu0 0.0
        %433 = vmatprep.subr.mxu0 0.0
        %434 = vmatpush2.xpose.msra.mxu0 0.0
        %435 = vmatprep.subr.mxu0 0.0
        %436 = vmatpush2.xpose.msra.mxu0 0.0
        %437 = vmatprep.subr.mxu0 0.0
        %438 = vmatpush2.xpose.msra.mxu0 0.0
        %439 = vmatprep.subr.mxu0 0.0
        %440 = vmatpush2.xpose.msra.mxu0 0.0
        %441 = vmatprep.subr.mxu0 0.0
        %442 = vmatpush2.xpose.msra.mxu0 0.0
        %443 = vmatprep.subr.mxu0 0.0
        %444 = vmatpush2.xpose.msra.mxu0 0.0
        %445 = vmatprep.subr.mxu0 0.0
        %446 = vmatpush2.xpose.msra.mxu0 0.0
        %447 = vmatprep.subr.mxu0 0.0
        %448 = vmatpush2.xpose.msra.mxu0 0.0
        %449 = vmatprep.subr.mxu0 0.0
        %450 = vmatpush2.xpose.msra.mxu0 0.0
        %451 = vmatprep.subr.mxu0 0.0
        %452 = vmatpush2.xpose.msra.mxu0 0.0
        %453 = vmatprep.mubr.f32.mxu0 0.0
        %454 = vmatmul.mubr.f32.gmra.mxu0 %v385
        %v455 = vpop.f32.mrf.mxu0
        %v456 = vadd.f32 0.0, %v455
        %v457 = vpop.f32.mrf.mxu0
        %458 = vdwg.mxu0
        %459 = vrot.lane.b32.xlu0 %v365, 96
        %v460 = vpop.permute.xlu0 %459
        %v461 = vsel %vm384, %v365, 0
        %v463 = vsel %vm384, %v460, 0
        %465 = vmatprep.subr.mxu0 0.0
        %466 = vmatpush1.xpose.msra.mxu0 0.0
        %467 = vmatprep.subr.mxu0 0.0
        %468 = vmatpush1.xpose.msra.mxu0 0.0
        %469 = vmatprep.subr.mxu0 0.0
        %470 = vmatpush1.xpose.msra.mxu0 0.0
        %471 = vmatprep.subr.mxu0 0.0
        %472 = vmatpush1.xpose.msra.mxu0 0.0
        %473 = vmatprep.subr.mxu0 0.0
        %474 = vmatpush1.xpose.msra.mxu0 0.0
        %475 = vmatprep.subr.mxu0 0.0
        %476 = vmatpush1.xpose.msra.mxu0 0.0
        %477 = vmatprep.subr.mxu0 0.0
        %478 = vmatpush1.xpose.msra.mxu0 0.0
        %479 = vmatprep.subr.mxu0 0.0
        %480 = vmatpush1.xpose.msra.mxu0 0.0
        %481 = vmatprep.subr.mxu0 0.0
        %482 = vmatpush1.xpose.msra.mxu0 0.0
        %483 = vmatprep.subr.mxu0 0.0
        %484 = vmatpush1.xpose.msra.mxu0 0.0
        %485 = vmatprep.subr.mxu0 0.0
        %486 = vmatpush1.xpose.msra.mxu0 0.0
        %487 = vmatprep.subr.mxu0 0.0
        %488 = vmatpush1.xpose.msra.mxu0 0.0
        %489 = vmatprep.subr.mxu0 0.0
        %490 = vmatpush1.xpose.msra.mxu0 0.0
        %491 = vmatprep.subr.mxu0 0.0
        %492 = vmatpush1.xpose.msra.mxu0 0.0
        %493 = vmatprep.subr.mxu0 0.0
        %494 = vmatpush1.xpose.msra.mxu0 0.0
        %495 = vmatprep.subr.mxu0 0.0
        %496 = vmatpush1.xpose.msra.mxu0 %v463
        %497 = vmatprep.subr.mxu0 0.0
        %498 = vmatpush2.xpose.msra.mxu0 0.0
        %499 = vmatprep.subr.mxu0 0.0
        %500 = vmatpush2.xpose.msra.mxu0 0.0
        %501 = vmatprep.subr.mxu0 0.0
        %502 = vmatpush2.xpose.msra.mxu0 0.0
        %503 = vmatprep.subr.mxu0 0.0
        %504 = vmatpush2.xpose.msra.mxu0 0.0
        %505 = vmatprep.subr.mxu0 0.0
        %506 = vmatpush2.xpose.msra.mxu0 0.0
        %507 = vmatprep.subr.mxu0 0.0
        %508 = vmatpush2.xpose.msra.mxu0 0.0
        %509 = vmatprep.subr.mxu0 0.0
        %510 = vmatpush2.xpose.msra.mxu0 0.0
        %511 = vmatprep.subr.mxu0 0.0
        %512 = vmatpush2.xpose.msra.mxu0 0.0
        %513 = vmatprep.subr.mxu0 0.0
        %514 = vmatpush2.xpose.msra.mxu0 0.0
        %515 = vmatprep.subr.mxu0 0.0
        %516 = vmatpush2.xpose.msra.mxu0 0.0
        %517 = vmatprep.subr.mxu0 0.0
        %518 = vmatpush2.xpose.msra.mxu0 0.0
        %519 = vmatprep.subr.mxu0 0.0
        %520 = vmatpush2.xpose.msra.mxu0 0.0
        %521 = vmatprep.subr.mxu0 0.0
        %522 = vmatpush2.xpose.msra.mxu0 0.0
        %523 = vmatprep.subr.mxu0 0.0
        %524 = vmatpush2.xpose.msra.mxu0 0.0
        %525 = vmatprep.subr.mxu0 0.0
        %526 = vmatpush2.xpose.msra.mxu0 0.0
        %527 = vmatprep.subr.mxu0 0.0
        %528 = vmatpush2.xpose.msra.mxu0 0.0
        %529 = vmatprep.mubr.f32.mxu0 0.0
        %530 = vmatmul.mubr.f32.gmra.mxu0 %v461
        %v531 = vpop.f32.mrf.mxu0
        %v532 = vadd.f32 0.0, %v531
        %v533 = vpop.f32.mrf.mxu0
        %534 = vdwg.mxu0
        %535 = vrot.lane.b32.xlu0 %v371, 96
        %v536 = vpop.permute.xlu0 %535
        %v537 = vsel %vm384, %v371, 0
        %v539 = vsel %vm384, %v536, 0
        %541 = vmatprep.subr.mxu0 0.0
        %542 = vmatpush1.xpose.msra.mxu0 0.0
        %543 = vmatprep.subr.mxu0 0.0
        %544 = vmatpush1.xpose.msra.mxu0 0.0
        %545 = vmatprep.subr.mxu0 0.0
        %546 = vmatpush1.xpose.msra.mxu0 0.0
        %547 = vmatprep.subr.mxu0 0.0
        %548 = vmatpush1.xpose.msra.mxu0 0.0
        %549 = vmatprep.subr.mxu0 0.0
        %550 = vmatpush1.xpose.msra.mxu0 0.0
        %551 = vmatprep.subr.mxu0 0.0
        %552 = vmatpush1.xpose.msra.mxu0 0.0
        %553 = vmatprep.subr.mxu0 0.0
        %554 = vmatpush1.xpose.msra.mxu0 0.0
        %555 = vmatprep.subr.mxu0 0.0
        %556 = vmatpush1.xpose.msra.mxu0 0.0
        %557 = vmatprep.subr.mxu0 0.0
        %558 = vmatpush1.xpose.msra.mxu0 0.0
        %559 = vmatprep.subr.mxu0 0.0
        %560 = vmatpush1.xpose.msra.mxu0 0.0
        %561 = vmatprep.subr.mxu0 0.0
        %562 = vmatpush1.xpose.msra.mxu0 0.0
        %563 = vmatprep.subr.mxu0 0.0
        %564 = vmatpush1.xpose.msra.mxu0 0.0
        %565 = vmatprep.subr.mxu0 0.0
        %566 = vmatpush1.xpose.msra.mxu0 0.0
        %567 = vmatprep.subr.mxu0 0.0
        %568 = vmatpush1.xpose.msra.mxu0 0.0
        %569 = vmatprep.subr.mxu0 0.0
        %570 = vmatpush1.xpose.msra.mxu0 0.0
        %571 = vmatprep.subr.mxu0 0.0
        %572 = vmatpush1.xpose.msra.mxu0 %v539
        %573 = vmatprep.subr.mxu0 0.0
        %574 = vmatpush2.xpose.msra.mxu0 0.0
        %575 = vmatprep.subr.mxu0 0.0
        %576 = vmatpush2.xpose.msra.mxu0 0.0
        %577 = vmatprep.subr.mxu0 0.0
        %578 = vmatpush2.xpose.msra.mxu0 0.0
        %579 = vmatprep.subr.mxu0 0.0
        %580 = vmatpush2.xpose.msra.mxu0 0.0
        %581 = vmatprep.subr.mxu0 0.0
        %582 = vmatpush2.xpose.msra.mxu0 0.0
        %583 = vmatprep.subr.mxu0 0.0
        %584 = vmatpush2.xpose.msra.mxu0 0.0
        %585 = vmatprep.subr.mxu0 0.0
        %586 = vmatpush2.xpose.msra.mxu0 0.0
        %587 = vmatprep.subr.mxu0 0.0
        %588 = vmatpush2.xpose.msra.mxu0 0.0
        %589 = vmatprep.subr.mxu0 0.0
        %590 = vmatpush2.xpose.msra.mxu0 0.0
        %591 = vmatprep.subr.mxu0 0.0
        %592 = vmatpush2.xpose.msra.mxu0 0.0
        %593 = vmatprep.subr.mxu0 0.0
        %594 = vmatpush2.xpose.msra.mxu0 0.0
        %595 = vmatprep.subr.mxu0 0.0
        %596 = vmatpush2.xpose.msra.mxu0 0.0
        %597 = vmatprep.subr.mxu0 0.0
        %598 = vmatpush2.xpose.msra.mxu0 0.0
        %599 = vmatprep.subr.mxu0 0.0
        %600 = vmatpush2.xpose.msra.mxu0 0.0
        %601 = vmatprep.subr.mxu0 0.0
        %602 = vmatpush2.xpose.msra.mxu0 0.0
        %603 = vmatprep.subr.mxu0 0.0
        %604 = vmatpush2.xpose.msra.mxu0 0.0
        %605 = vmatprep.mubr.f32.mxu0 0.0
        %606 = vmatmul.mubr.f32.gmra.mxu0 %v537
        %v607 = vpop.f32.mrf.mxu0
        %v608 = vadd.f32 0.0, %v607
        %v609 = vpop.f32.mrf.mxu0
        %610 = vdwg.mxu0
        %611 = vrot.lane.b32.xlu0 %v373, 96
        %v612 = vpop.permute.xlu0 %611
        %v613 = vsel %vm384, %v373, 0
        %v615 = vsel %vm384, %v612, 0
        %617 = vmatprep.subr.mxu0 0.0
        %618 = vmatpush1.xpose.msra.mxu0 0.0
        %619 = vmatprep.subr.mxu0 0.0
        %620 = vmatpush1.xpose.msra.mxu0 0.0
        %621 = vmatprep.subr.mxu0 0.0
        %622 = vmatpush1.xpose.msra.mxu0 0.0
        %623 = vmatprep.subr.mxu0 0.0
        %624 = vmatpush1.xpose.msra.mxu0 0.0
        %625 = vmatprep.subr.mxu0 0.0
        %626 = vmatpush1.xpose.msra.mxu0 0.0
        %627 = vmatprep.subr.mxu0 0.0
        %628 = vmatpush1.xpose.msra.mxu0 0.0
        %629 = vmatprep.subr.mxu0 0.0
        %630 = vmatpush1.xpose.msra.mxu0 0.0
        %631 = vmatprep.subr.mxu0 0.0
        %632 = vmatpush1.xpose.msra.mxu0 0.0
        %633 = vmatprep.subr.mxu0 0.0
        %634 = vmatpush1.xpose.msra.mxu0 0.0
        %635 = vmatprep.subr.mxu0 0.0
        %636 = vmatpush1.xpose.msra.mxu0 0.0
        %637 = vmatprep.subr.mxu0 0.0
        %638 = vmatpush1.xpose.msra.mxu0 0.0
        %639 = vmatprep.subr.mxu0 0.0
        %640 = vmatpush1.xpose.msra.mxu0 0.0
        %641 = vmatprep.subr.mxu0 0.0
        %642 = vmatpush1.xpose.msra.mxu0 0.0
        %643 = vmatprep.subr.mxu0 0.0
        %644 = vmatpush1.xpose.msra.mxu0 0.0
        %645 = vmatprep.subr.mxu0 0.0
        %646 = vmatpush1.xpose.msra.mxu0 0.0
        %647 = vmatprep.subr.mxu0 0.0
        %648 = vmatpush1.xpose.msra.mxu0 %v615
        %649 = vmatprep.subr.mxu0 0.0
        %650 = vmatpush2.xpose.msra.mxu0 0.0
        %651 = vmatprep.subr.mxu0 0.0
        %652 = vmatpush2.xpose.msra.mxu0 0.0
        %653 = vmatprep.subr.mxu0 0.0
        %654 = vmatpush2.xpose.msra.mxu0 0.0
        %655 = vmatprep.subr.mxu0 0.0
        %656 = vmatpush2.xpose.msra.mxu0 0.0
        %657 = vmatprep.subr.mxu0 0.0
        %658 = vmatpush2.xpose.msra.mxu0 0.0
        %659 = vmatprep.subr.mxu0 0.0
        %660 = vmatpush2.xpose.msra.mxu0 0.0
        %661 = vmatprep.subr.mxu0 0.0
        %662 = vmatpush2.xpose.msra.mxu0 0.0
        %663 = vmatprep.subr.mxu0 0.0
        %664 = vmatpush2.xpose.msra.mxu0 0.0
        %665 = vmatprep.subr.mxu0 0.0
        %666 = vmatpush2.xpose.msra.mxu0 0.0
        %667 = vmatprep.subr.mxu0 0.0
        %668 = vmatpush2.xpose.msra.mxu0 0.0
        %669 = vmatprep.subr.mxu0 0.0
        %670 = vmatpush2.xpose.msra.mxu0 0.0
        %671 = vmatprep.subr.mxu0 0.0
        %672 = vmatpush2.xpose.msra.mxu0 0.0
        %673 = vmatprep.subr.mxu0 0.0
        %674 = vmatpush2.xpose.msra.mxu0 0.0
        %675 = vmatprep.subr.mxu0 0.0
        %676 = vmatpush2.xpose.msra.mxu0 0.0
        %677 = vmatprep.subr.mxu0 0.0
        %678 = vmatpush2.xpose.msra.mxu0 0.0
        %679 = vmatprep.subr.mxu0 0.0
        %680 = vmatpush2.xpose.msra.mxu0 0.0
        %681 = vmatprep.mubr.f32.mxu0 0.0
        %682 = vmatmul.mubr.f32.gmra.mxu0 %v613
        %v683 = vpop.f32.mrf.mxu0
        %v684 = vadd.f32 0.0, %v683
        %v685 = vpop.f32.mrf.mxu0
        %686 = vdwg.mxu0
        %687 = vrot.lane.b32.xlu0 %v375, 96
        %v688 = vpop.permute.xlu0 %687
        %v689 = vsel %vm384, %v375, 0
        %v691 = vsel %vm384, %v688, 0
        %693 = vmatprep.subr.mxu0 0.0
        %694 = vmatpush1.xpose.msra.mxu0 0.0
        %695 = vmatprep.subr.mxu0 0.0
        %696 = vmatpush1.xpose.msra.mxu0 0.0
        %697 = vmatprep.subr.mxu0 0.0
        %698 = vmatpush1.xpose.msra.mxu0 0.0
        %699 = vmatprep.subr.mxu0 0.0
        %700 = vmatpush1.xpose.msra.mxu0 0.0
        %701 = vmatprep.subr.mxu0 0.0
        %702 = vmatpush1.xpose.msra.mxu0 0.0
        %703 = vmatprep.subr.mxu0 0.0
        %704 = vmatpush1.xpose.msra.mxu0 0.0
        %705 = vmatprep.subr.mxu0 0.0
        %706 = vmatpush1.xpose.msra.mxu0 0.0
        %707 = vmatprep.subr.mxu0 0.0
        %708 = vmatpush1.xpose.msra.mxu0 0.0
        %709 = vmatprep.subr.mxu0 0.0
        %710 = vmatpush1.xpose.msra.mxu0 0.0
        %711 = vmatprep.subr.mxu0 0.0
        %712 = vmatpush1.xpose.msra.mxu0 0.0
        %713 = vmatprep.subr.mxu0 0.0
        %714 = vmatpush1.xpose.msra.mxu0 0.0
        %715 = vmatprep.subr.mxu0 0.0
        %716 = vmatpush1.xpose.msra.mxu0 0.0
        %717 = vmatprep.subr.mxu0 0.0
        %718 = vmatpush1.xpose.msra.mxu0 0.0
        %719 = vmatprep.subr.mxu0 0.0
        %720 = vmatpush1.xpose.msra.mxu0 0.0
        %721 = vmatprep.subr.mxu0 0.0
        %722 = vmatpush1.xpose.msra.mxu0 0.0
        %723 = vmatprep.subr.mxu0 0.0
        %724 = vmatpush1.xpose.msra.mxu0 %v691
        %725 = vmatprep.subr.mxu0 0.0
        %726 = vmatpush2.xpose.msra.mxu0 0.0
        %727 = vmatprep.subr.mxu0 0.0
        %728 = vmatpush2.xpose.msra.mxu0 0.0
        %729 = vmatprep.subr.mxu0 0.0
        %730 = vmatpush2.xpose.msra.mxu0 0.0
        %731 = vmatprep.subr.mxu0 0.0
        %732 = vmatpush2.xpose.msra.mxu0 0.0
        %733 = vmatprep.subr.mxu0 0.0
        %734 = vmatpush2.xpose.msra.mxu0 0.0
        %735 = vmatprep.subr.mxu0 0.0
        %736 = vmatpush2.xpose.msra.mxu0 0.0
        %737 = vmatprep.subr.mxu0 0.0
        %738 = vmatpush2.xpose.msra.mxu0 0.0
        %739 = vmatprep.subr.mxu0 0.0
        %740 = vmatpush2.xpose.msra.mxu0 0.0
        %741 = vmatprep.subr.mxu0 0.0
        %742 = vmatpush2.xpose.msra.mxu0 0.0
        %743 = vmatprep.subr.mxu0 0.0
        %744 = vmatpush2.xpose.msra.mxu0 0.0
        %745 = vmatprep.subr.mxu0 0.0
        %746 = vmatpush2.xpose.msra.mxu0 0.0
        %747 = vmatprep.subr.mxu0 0.0
        %748 = vmatpush2.xpose.msra.mxu0 0.0
        %749 = vmatprep.subr.mxu0 0.0
        %750 = vmatpush2.xpose.msra.mxu0 0.0
        %751 = vmatprep.subr.mxu0 0.0
        %752 = vmatpush2.xpose.msra.mxu0 0.0
        %753 = vmatprep.subr.mxu0 0.0
        %754 = vmatpush2.xpose.msra.mxu0 0.0
        %755 = vmatprep.subr.mxu0 0.0
        %756 = vmatpush2.xpose.msra.mxu0 0.0
        %757 = vmatprep.mubr.f32.mxu0 0.0
        %758 = vmatmul.mubr.f32.gmra.mxu0 %v689
        %v759 = vpop.f32.mrf.mxu0
        %v760 = vadd.f32 0.0, %v759
        %v761 = vpop.f32.mrf.mxu0
        %762 = vdwg.mxu0
        %763 = vrot.lane.b32.xlu0 %v377, 96
        %v764 = vpop.permute.xlu0 %763
        %v765 = vsel %vm384, %v377, 0
        %v767 = vsel %vm384, %v764, 0
        %769 = vmatprep.subr.mxu0 0.0
        %770 = vmatpush1.xpose.msra.mxu0 0.0
        %771 = vmatprep.subr.mxu0 0.0
        %772 = vmatpush1.xpose.msra.mxu0 0.0
        %773 = vmatprep.subr.mxu0 0.0
        %774 = vmatpush1.xpose.msra.mxu0 0.0
        %775 = vmatprep.subr.mxu0 0.0
        %776 = vmatpush1.xpose.msra.mxu0 0.0
        %777 = vmatprep.subr.mxu0 0.0
        %778 = vmatpush1.xpose.msra.mxu0 0.0
        %779 = vmatprep.subr.mxu0 0.0
        %780 = vmatpush1.xpose.msra.mxu0 0.0
        %781 = vmatprep.subr.mxu0 0.0
        %782 = vmatpush1.xpose.msra.mxu0 0.0
        %783 = vmatprep.subr.mxu0 0.0
        %784 = vmatpush1.xpose.msra.mxu0 0.0
        %785 = vmatprep.subr.mxu0 0.0
        %786 = vmatpush1.xpose.msra.mxu0 0.0
        %787 = vmatprep.subr.mxu0 0.0
        %788 = vmatpush1.xpose.msra.mxu0 0.0
        %789 = vmatprep.subr.mxu0 0.0
        %790 = vmatpush1.xpose.msra.mxu0 0.0
        %791 = vmatprep.subr.mxu0 0.0
        %792 = vmatpush1.xpose.msra.mxu0 0.0
        %793 = vmatprep.subr.mxu0 0.0
        %794 = vmatpush1.xpose.msra.mxu0 0.0
        %795 = vmatprep.subr.mxu0 0.0
        %796 = vmatpush1.xpose.msra.mxu0 0.0
        %797 = vmatprep.subr.mxu0 0.0
        %798 = vmatpush1.xpose.msra.mxu0 0.0
        %799 = vmatprep.subr.mxu0 0.0
        %800 = vmatpush1.xpose.msra.mxu0 %v767
        %801 = vmatprep.subr.mxu0 0.0
        %802 = vmatpush2.xpose.msra.mxu0 0.0
        %803 = vmatprep.subr.mxu0 0.0
        %804 = vmatpush2.xpose.msra.mxu0 0.0
        %805 = vmatprep.subr.mxu0 0.0
        %806 = vmatpush2.xpose.msra.mxu0 0.0
        %807 = vmatprep.subr.mxu0 0.0
        %808 = vmatpush2.xpose.msra.mxu0 0.0
        %809 = vmatprep.subr.mxu0 0.0
        %810 = vmatpush2.xpose.msra.mxu0 0.0
        %811 = vmatprep.subr.mxu0 0.0
        %812 = vmatpush2.xpose.msra.mxu0 0.0
        %813 = vmatprep.subr.mxu0 0.0
        %814 = vmatpush2.xpose.msra.mxu0 0.0
        %815 = vmatprep.subr.mxu0 0.0
        %816 = vmatpush2.xpose.msra.mxu0 0.0
        %817 = vmatprep.subr.mxu0 0.0
        %818 = vmatpush2.xpose.msra.mxu0 0.0
        %819 = vmatprep.subr.mxu0 0.0
        %820 = vmatpush2.xpose.msra.mxu0 0.0
        %821 = vmatprep.subr.mxu0 0.0
        %822 = vmatpush2.xpose.msra.mxu0 0.0
        %823 = vmatprep.subr.mxu0 0.0
        %824 = vmatpush2.xpose.msra.mxu0 0.0
        %825 = vmatprep.subr.mxu0 0.0
        %826 = vmatpush2.xpose.msra.mxu0 0.0
        %827 = vmatprep.subr.mxu0 0.0
        %828 = vmatpush2.xpose.msra.mxu0 0.0
        %829 = vmatprep.subr.mxu0 0.0
        %830 = vmatpush2.xpose.msra.mxu0 0.0
        %831 = vmatprep.subr.mxu0 0.0
        %832 = vmatpush2.xpose.msra.mxu0 0.0
        %833 = vmatprep.mubr.f32.mxu0 0.0
        %834 = vmatmul.mubr.f32.gmra.mxu0 %v765
        %v835 = vpop.f32.mrf.mxu0
        %v836 = vadd.f32 0.0, %v835
        %v837 = vpop.f32.mrf.mxu0
        %838 = vdwg.mxu0
        %839 = vrot.lane.b32.xlu0 %v379, 96
        %v840 = vpop.permute.xlu0 %839
        %v841 = vsel %vm384, %v379, 0
        %v843 = vsel %vm384, %v840, 0
        %845 = vmatprep.subr.mxu0 0.0
        %846 = vmatpush1.xpose.msra.mxu0 0.0
        %847 = vmatprep.subr.mxu0 0.0
        %848 = vmatpush1.xpose.msra.mxu0 0.0
        %849 = vmatprep.subr.mxu0 0.0
        %850 = vmatpush1.xpose.msra.mxu0 0.0
        %851 = vmatprep.subr.mxu0 0.0
        %852 = vmatpush1.xpose.msra.mxu0 0.0
        %853 = vmatprep.subr.mxu0 0.0
        %854 = vmatpush1.xpose.msra.mxu0 0.0
        %855 = vmatprep.subr.mxu0 0.0
        %856 = vmatpush1.xpose.msra.mxu0 0.0
        %857 = vmatprep.subr.mxu0 0.0
        %858 = vmatpush1.xpose.msra.mxu0 0.0
        %859 = vmatprep.subr.mxu0 0.0
        %860 = vmatpush1.xpose.msra.mxu0 0.0
        %861 = vmatprep.subr.mxu0 0.0
        %862 = vmatpush1.xpose.msra.mxu0 0.0
        %863 = vmatprep.subr.mxu0 0.0
        %864 = vmatpush1.xpose.msra.mxu0 0.0
        %865 = vmatprep.subr.mxu0 0.0
        %866 = vmatpush1.xpose.msra.mxu0 0.0
        %867 = vmatprep.subr.mxu0 0.0
        %868 = vmatpush1.xpose.msra.mxu0 0.0
        %869 = vmatprep.subr.mxu0 0.0
        %870 = vmatpush1.xpose.msra.mxu0 0.0
        %871 = vmatprep.subr.mxu0 0.0
        %872 = vmatpush1.xpose.msra.mxu0 0.0
        %873 = vmatprep.subr.mxu0 0.0
        %874 = vmatpush1.xpose.msra.mxu0 0.0
        %875 = vmatprep.subr.mxu0 0.0
        %876 = vmatpush1.xpose.msra.mxu0 %v843
        %877 = vmatprep.subr.mxu0 0.0
        %878 = vmatpush2.xpose.msra.mxu0 0.0
        %879 = vmatprep.subr.mxu0 0.0
        %880 = vmatpush2.xpose.msra.mxu0 0.0
        %881 = vmatprep.subr.mxu0 0.0
        %882 = vmatpush2.xpose.msra.mxu0 0.0
        %883 = vmatprep.subr.mxu0 0.0
        %884 = vmatpush2.xpose.msra.mxu0 0.0
        %885 = vmatprep.subr.mxu0 0.0
        %886 = vmatpush2.xpose.msra.mxu0 0.0
        %887 = vmatprep.subr.mxu0 0.0
        %888 = vmatpush2.xpose.msra.mxu0 0.0
        %889 = vmatprep.subr.mxu0 0.0
        %890 = vmatpush2.xpose.msra.mxu0 0.0
        %891 = vmatprep.subr.mxu0 0.0
        %892 = vmatpush2.xpose.msra.mxu0 0.0
        %893 = vmatprep.subr.mxu0 0.0
        %894 = vmatpush2.xpose.msra.mxu0 0.0
        %895 = vmatprep.subr.mxu0 0.0
        %896 = vmatpush2.xpose.msra.mxu0 0.0
        %897 = vmatprep.subr.mxu0 0.0
        %898 = vmatpush2.xpose.msra.mxu0 0.0
        %899 = vmatprep.subr.mxu0 0.0
        %900 = vmatpush2.xpose.msra.mxu0 0.0
        %901 = vmatprep.subr.mxu0 0.0
        %902 = vmatpush2.xpose.msra.mxu0 0.0
        %903 = vmatprep.subr.mxu0 0.0
        %904 = vmatpush2.xpose.msra.mxu0 0.0
        %905 = vmatprep.subr.mxu0 0.0
        %906 = vmatpush2.xpose.msra.mxu0 0.0
        %907 = vmatprep.subr.mxu0 0.0
        %908 = vmatpush2.xpose.msra.mxu0 0.0
        %909 = vmatprep.mubr.f32.mxu0 0.0
        %910 = vmatmul.mubr.f32.gmra.mxu0 %v841
        %v911 = vpop.f32.mrf.mxu0
        %v912 = vadd.f32 0.0, %v911
        %v913 = vpop.f32.mrf.mxu0
        %914 = vdwg.mxu0
        %915 = vrot.lane.b32.xlu0 %v381, 96
        %v916 = vpop.permute.xlu0 %915
        %v917 = vsel %vm384, %v381, 0
        %v919 = vsel %vm384, %v916, 0
        %921 = vmatprep.subr.mxu0 0.0
        %922 = vmatpush1.xpose.msra.mxu0 0.0
        %923 = vmatprep.subr.mxu0 0.0
        %924 = vmatpush1.xpose.msra.mxu0 0.0
        %925 = vmatprep.subr.mxu0 0.0
        %926 = vmatpush1.xpose.msra.mxu0 0.0
        %927 = vmatprep.subr.mxu0 0.0
        %928 = vmatpush1.xpose.msra.mxu0 0.0
        %929 = vmatprep.subr.mxu0 0.0
        %930 = vmatpush1.xpose.msra.mxu0 0.0
        %931 = vmatprep.subr.mxu0 0.0
        %932 = vmatpush1.xpose.msra.mxu0 0.0
        %933 = vmatprep.subr.mxu0 0.0
        %934 = vmatpush1.xpose.msra.mxu0 0.0
        %935 = vmatprep.subr.mxu0 0.0
        %936 = vmatpush1.xpose.msra.mxu0 0.0
        %937 = vmatprep.subr.mxu0 0.0
        %938 = vmatpush1.xpose.msra.mxu0 0.0
        %939 = vmatprep.subr.mxu0 0.0
        %940 = vmatpush1.xpose.msra.mxu0 0.0
        %941 = vmatprep.subr.mxu0 0.0
        %942 = vmatpush1.xpose.msra.mxu0 0.0
        %943 = vmatprep.subr.mxu0 0.0
        %944 = vmatpush1.xpose.msra.mxu0 0.0
        %945 = vmatprep.subr.mxu0 0.0
        %946 = vmatpush1.xpose.msra.mxu0 0.0
        %947 = vmatprep.subr.mxu0 0.0
        %948 = vmatpush1.xpose.msra.mxu0 0.0
        %949 = vmatprep.subr.mxu0 0.0
        %950 = vmatpush1.xpose.msra.mxu0 0.0
        %951 = vmatprep.subr.mxu0 0.0
        %952 = vmatpush1.xpose.msra.mxu0 %v919
        %953 = vmatprep.subr.mxu0 0.0
        %954 = vmatpush2.xpose.msra.mxu0 0.0
        %955 = vmatprep.subr.mxu0 0.0
        %956 = vmatpush2.xpose.msra.mxu0 0.0
        %957 = vmatprep.subr.mxu0 0.0
        %958 = vmatpush2.xpose.msra.mxu0 0.0
        %959 = vmatprep.subr.mxu0 0.0
        %960 = vmatpush2.xpose.msra.mxu0 0.0
        %961 = vmatprep.subr.mxu0 0.0
        %962 = vmatpush2.xpose.msra.mxu0 0.0
        %963 = vmatprep.subr.mxu0 0.0
        %964 = vmatpush2.xpose.msra.mxu0 0.0
        %965 = vmatprep.subr.mxu0 0.0
        %966 = vmatpush2.xpose.msra.mxu0 0.0
        %967 = vmatprep.subr.mxu0 0.0
        %968 = vmatpush2.xpose.msra.mxu0 0.0
        %969 = vmatprep.subr.mxu0 0.0
        %970 = vmatpush2.xpose.msra.mxu0 0.0
        %971 = vmatprep.subr.mxu0 0.0
        %972 = vmatpush2.xpose.msra.mxu0 0.0
        %973 = vmatprep.subr.mxu0 0.0
        %974 = vmatpush2.xpose.msra.mxu0 0.0
        %975 = vmatprep.subr.mxu0 0.0
        %976 = vmatpush2.xpose.msra.mxu0 0.0
        %977 = vmatprep.subr.mxu0 0.0
        %978 = vmatpush2.xpose.msra.mxu0 0.0
        %979 = vmatprep.subr.mxu0 0.0
        %980 = vmatpush2.xpose.msra.mxu0 0.0
        %981 = vmatprep.subr.mxu0 0.0
        %982 = vmatpush2.xpose.msra.mxu0 0.0
        %983 = vmatprep.subr.mxu0 0.0
        %984 = vmatpush2.xpose.msra.mxu0 0.0
        %985 = vmatprep.mubr.f32.mxu0 0.0
        %986 = vmatmul.mubr.f32.gmra.mxu0 %v917
        %v987 = vpop.f32.mrf.mxu0
        %v988 = vadd.f32 0.0, %v987
        %v989 = vpop.f32.mrf.mxu0
        %990 = vdwg.mxu0
        %v991 = vlaneseq
        %v992 = vshrl.u32 %v991, 7
        %v993 = vlaneseq
        %v994 = vand.u32 %v993, 127
        %vm995 = vcmp.ge.s32.totalorder %v992, %v994
        %v996 = vsel %vm995, 1, 0
        %vm997 = vcmp.eq.s32.totalorder %v996, 1
        %v998 = vsel %vm997, %v456, -1e+30
        %v999 = vsel %vm997, %v532, -1e+30
        %v1000 = vsel %vm997, %v608, -1e+30
        %v1001 = vsel %vm997, %v684, -1e+30
        %v1002 = vsel %vm997, %v760, -1e+30
        %v1003 = vsel %vm997, %v836, -1e+30
        %v1004 = vsel %vm997, %v912, -1e+30
        %v1005 = vsel %vm997, %v988, -1e+30
        %v1006 = vsel %vm384, %v998, -inf
        %1007 = vmax.xlane.f32.xlu0 %v1006
        %v1008 = vpop.xlane.xlu0 %1007
        %v1009 = vsel %vm384, %v999, -inf
        %1010 = vmax.xlane.f32.xlu0 %v1009
        %v1011 = vpop.xlane.xlu0 %1010
        %v1012 = vsel %vm384, %v1000, -inf
        %1013 = vmax.xlane.f32.xlu0 %v1012
        %v1014 = vpop.xlane.xlu0 %1013
        %v1015 = vsel %vm384, %v1001, -inf
        %1016 = vmax.xlane.f32.xlu0 %v1015
        %v1017 = vpop.xlane.xlu0 %1016
        %v1018 = vsel %vm384, %v1002, -inf
        %1019 = vmax.xlane.f32.xlu0 %v1018
        %v1020 = vpop.xlane.xlu0 %1019
        %v1021 = vsel %vm384, %v1003, -inf
        %1022 = vmax.xlane.f32.xlu0 %v1021
        %v1023 = vpop.xlane.xlu0 %1022
        %v1024 = vsel %vm384, %v1004, -inf
        %1025 = vmax.xlane.f32.xlu0 %v1024
        %v1026 = vpop.xlane.xlu0 %1025
        %v1027 = vsel %vm384, %v1005, -inf
        %1028 = vmax.xlane.f32.xlu0 %v1027
        %v1029 = vpop.xlane.xlu0 %1028
        %v1030 = vsub.f32 %v998, %v1008
        %v1031 = vsub.f32 %v999, %v1011
        %v1032 = vsub.f32 %v1000, %v1014
        %v1033 = vsub.f32 %v1001, %v1017
        %v1034 = vsub.f32 %v1002, %v1020
        %v1035 = vsub.f32 %v1003, %v1023
        %v1036 = vsub.f32 %v1004, %v1026
        %v1037 = vsub.f32 %v1005, %v1029
        %v1038 = vmul.f32 %v1030, 1.442695
        %v1039 = vpow.pop %v1038
        %v1040 = vmul.f32 %v1031, 1.442695
        %v1041 = vpow.pop %v1040
        %v1042 = vmul.f32 %v1032, 1.442695
        %v1043 = vpow.pop %v1042
        %v1044 = vmul.f32 %v1033, 1.442695
        %v1045 = vpow.pop %v1044
        %v1046 = vmul.f32 %v1034, 1.442695
        %v1047 = vpow.pop %v1046
        %v1048 = vmul.f32 %v1035, 1.442695
        %v1049 = vpow.pop %v1048
        %v1050 = vmul.f32 %v1036, 1.442695
        %v1051 = vpow.pop %v1050
        %v1052 = vmul.f32 %v1037, 1.442695
        %v1053 = vpow.pop %v1052
        %v1054 = vsel %vm384, %v1039, 0.0
        %1055 = vadd.xlane.f32.xlu0 %v1054
        %v1056 = vpop.xlane.xlu0 %1055
        %v1057 = vsel %vm384, %v1041, 0.0
        %1058 = vadd.xlane.f32.xlu0 %v1057
        %v1059 = vpop.xlane.xlu0 %1058
        %v1060 = vsel %vm384, %v1043, 0.0
        %1061 = vadd.xlane.f32.xlu0 %v1060
        %v1062 = vpop.xlane.xlu0 %1061
        %v1063 = vsel %vm384, %v1045, 0.0
        %1064 = vadd.xlane.f32.xlu0 %v1063
        %v1065 = vpop.xlane.xlu0 %1064
        %v1066 = vsel %vm384, %v1047, 0.0
        %1067 = vadd.xlane.f32.xlu0 %v1066
        %v1068 = vpop.xlane.xlu0 %1067
        %v1069 = vsel %vm384, %v1049, 0.0
        %1070 = vadd.xlane.f32.xlu0 %v1069
        %v1071 = vpop.xlane.xlu0 %1070
        %v1072 = vsel %vm384, %v1051, 0.0
        %1073 = vadd.xlane.f32.xlu0 %v1072
        %v1074 = vpop.xlane.xlu0 %1073
        %v1075 = vsel %vm384, %v1053, 0.0
        %1076 = vadd.xlane.f32.xlu0 %v1075
        %v1077 = vpop.xlane.xlu0 %1076
        %v1078 = vrcp.pop %v1056
        %v1079 = vrcp.pop %v1059
        %v1080 = vrcp.pop %v1062
        %v1081 = vrcp.pop %v1065
        %v1082 = vrcp.pop %v1068
        %v1083 = vrcp.pop %v1071
        %v1084 = vrcp.pop %v1074
        %v1085 = vrcp.pop %v1077
        %v1086 = vmul.f32 %v1039, %v1078
        %v1087 = vmul.f32 %v1041, %v1079
        %v1088 = vmul.f32 %v1043, %v1080
        %v1089 = vmul.f32 %v1045, %v1081
        %v1090 = vmul.f32 %v1047, %v1082
        %v1091 = vmul.f32 %v1049, %v1083
        %v1092 = vmul.f32 %v1051, %v1084
        %v1093 = vmul.f32 %v1053, %v1085
        %1094 = vrot.lane.b32.xlu0 %v360, 64
        %v1095 = vpop.permute.xlu0 %1094
        %v1098 = vsel %vm384, %v1086, 0
        %1100 = vmatprep.subr.mxu0 0.0
        %1101 = vmatpush1.msra.mxu0 0.0
        %1102 = vmatprep.subr.mxu0 0.0
        %1103 = vmatpush1.msra.mxu0 0.0
        %1104 = vmatprep.subr.mxu0 0.0
        %1105 = vmatpush1.msra.mxu0 0.0
        %1106 = vmatprep.subr.mxu0 0.0
        %1107 = vmatpush1.msra.mxu0 0.0
        %1108 = vmatprep.subr.mxu0 0.0
        %1109 = vmatpush1.msra.mxu0 0.0
        %1110 = vmatprep.subr.mxu0 0.0
        %1111 = vmatpush1.msra.mxu0 0.0
        %1112 = vmatprep.subr.mxu0 0.0
        %1113 = vmatpush1.msra.mxu0 0.0
        %1114 = vmatprep.subr.mxu0 0.0
        %1115 = vmatpush1.msra.mxu0 0.0
        %1116 = vmatprep.subr.mxu0 0.0
        %1117 = vmatpush1.msra.mxu0 0.0
        %1118 = vmatprep.subr.mxu0 0.0
        %1119 = vmatpush1.msra.mxu0 0.0
        %1120 = vmatprep.subr.mxu0 0.0
        %1121 = vmatpush1.msra.mxu0 0.0
        %1122 = vmatprep.subr.mxu0 0.0
        %1123 = vmatpush1.msra.mxu0 0.0
        %1124 = vmatprep.subr.mxu0 0.0
        %1125 = vmatpush1.msra.mxu0 0.0
        %1126 = vmatprep.subr.mxu0 0.0
        %1127 = vmatpush1.msra.mxu0 0.0
        %1128 = vmatprep.subr.mxu0 0.0
        %1129 = vmatpush1.msra.mxu0 0.0
        %1130 = vmatprep.subr.mxu0 0.0
        %1131 = vmatpush1.msra.mxu0 %v1095
        %1132 = vmatprep.subr.mxu0 0.0
        %1133 = vmatpush2.msra.mxu0 0.0
        %1134 = vmatprep.subr.mxu0 0.0
        %1135 = vmatpush2.msra.mxu0 0.0
        %1136 = vmatprep.subr.mxu0 0.0
        %1137 = vmatpush2.msra.mxu0 0.0
        %1138 = vmatprep.subr.mxu0 0.0
        %1139 = vmatpush2.msra.mxu0 0.0
        %1140 = vmatprep.subr.mxu0 0.0
        %1141 = vmatpush2.msra.mxu0 0.0
        %1142 = vmatprep.subr.mxu0 0.0
        %1143 = vmatpush2.msra.mxu0 0.0
        %1144 = vmatprep.subr.mxu0 0.0
        %1145 = vmatpush2.msra.mxu0 0.0
        %1146 = vmatprep.subr.mxu0 0.0
        %1147 = vmatpush2.msra.mxu0 0.0
        %1148 = vmatprep.subr.mxu0 0.0
        %1149 = vmatpush2.msra.mxu0 0.0
        %1150 = vmatprep.subr.mxu0 0.0
        %1151 = vmatpush2.msra.mxu0 0.0
        %1152 = vmatprep.subr.mxu0 0.0
        %1153 = vmatpush2.msra.mxu0 0.0
        %1154 = vmatprep.subr.mxu0 0.0
        %1155 = vmatpush2.msra.mxu0 0.0
        %1156 = vmatprep.subr.mxu0 0.0
        %1157 = vmatpush2.msra.mxu0 0.0
        %1158 = vmatprep.subr.mxu0 0.0
        %1159 = vmatpush2.msra.mxu0 0.0
        %1160 = vmatprep.subr.mxu0 0.0
        %1161 = vmatpush2.msra.mxu0 0.0
        %1162 = vmatprep.subr.mxu0 0.0
        %1163 = vmatpush2.msra.mxu0 0.0
        %1164 = vmatprep.mubr.f32.mxu0 0.0
        %1165 = vmatmul.mubr.f32.gmra.mxu0 %v1098
        %v1166 = vpop.f32.mrf.mxu0
        %v1167 = vadd.f32 0.0, %v1166
        %v1168 = vpop.f32.mrf.mxu0
        %1169 = vdwg.mxu0
        %1170 = vrot.lane.b32.xlu0 %v365, 64
        %v1171 = vpop.permute.xlu0 %1170
        %v1174 = vsel %vm384, %v1087, 0
        %1176 = vmatprep.subr.mxu0 0.0
        %1177 = vmatpush1.msra.mxu0 0.0
        %1178 = vmatprep.subr.mxu0 0.0
        %1179 = vmatpush1.msra.mxu0 0.0
        %1180 = vmatprep.subr.mxu0 0.0
        %1181 = vmatpush1.msra.mxu0 0.0
        %1182 = vmatprep.subr.mxu0 0.0
        %1183 = vmatpush1.msra.mxu0 0.0
        %1184 = vmatprep.subr.mxu0 0.0
        %1185 = vmatpush1.msra.mxu0 0.0
        %1186 = vmatprep.subr.mxu0 0.0
        %1187 = vmatpush1.msra.mxu0 0.0
        %1188 = vmatprep.subr.mxu0 0.0
        %1189 = vmatpush1.msra.mxu0 0.0
        %1190 = vmatprep.subr.mxu0 0.0
        %1191 = vmatpush1.msra.mxu0 0.0
        %1192 = vmatprep.subr.mxu0 0.0
        %1193 = vmatpush1.msra.mxu0 0.0
        %1194 = vmatprep.subr.mxu0 0.0
        %1195 = vmatpush1.msra.mxu0 0.0
        %1196 = vmatprep.subr.mxu0 0.0
        %1197 = vmatpush1.msra.mxu0 0.0
        %1198 = vmatprep.subr.mxu0 0.0
        %1199 = vmatpush1.msra.mxu0 0.0
        %1200 = vmatprep.subr.mxu0 0.0
        %1201 = vmatpush1.msra.mxu0 0.0
        %1202 = vmatprep.subr.mxu0 0.0
        %1203 = vmatpush1.msra.mxu0 0.0
        %1204 = vmatprep.subr.mxu0 0.0
        %1205 = vmatpush1.msra.mxu0 0.0
        %1206 = vmatprep.subr.mxu0 0.0
        %1207 = vmatpush1.msra.mxu0 %v1171
        %1208 = vmatprep.subr.mxu0 0.0
        %1209 = vmatpush2.msra.mxu0 0.0
        %1210 = vmatprep.subr.mxu0 0.0
        %1211 = vmatpush2.msra.mxu0 0.0
        %1212 = vmatprep.subr.mxu0 0.0
        %1213 = vmatpush2.msra.mxu0 0.0
        %1214 = vmatprep.subr.mxu0 0.0
        %1215 = vmatpush2.msra.mxu0 0.0
        %1216 = vmatprep.subr.mxu0 0.0
        %1217 = vmatpush2.msra.mxu0 0.0
        %1218 = vmatprep.subr.mxu0 0.0
        %1219 = vmatpush2.msra.mxu0 0.0
        %1220 = vmatprep.subr.mxu0 0.0
        %1221 = vmatpush2.msra.mxu0 0.0
        %1222 = vmatprep.subr.mxu0 0.0
        %1223 = vmatpush2.msra.mxu0 0.0
        %1224 = vmatprep.subr.mxu0 0.0
        %1225 = vmatpush2.msra.mxu0 0.0
        %1226 = vmatprep.subr.mxu0 0.0
        %1227 = vmatpush2.msra.mxu0 0.0
        %1228 = vmatprep.subr.mxu0 0.0
        %1229 = vmatpush2.msra.mxu0 0.0
        %1230 = vmatprep.subr.mxu0 0.0
        %1231 = vmatpush2.msra.mxu0 0.0
        %1232 = vmatprep.subr.mxu0 0.0
        %1233 = vmatpush2.msra.mxu0 0.0
        %1234 = vmatprep.subr.mxu0 0.0
        %1235 = vmatpush2.msra.mxu0 0.0
        %1236 = vmatprep.subr.mxu0 0.0
        %1237 = vmatpush2.msra.mxu0 0.0
        %1238 = vmatprep.subr.mxu0 0.0
        %1239 = vmatpush2.msra.mxu0 0.0
        %1240 = vmatprep.mubr.f32.mxu0 0.0
        %1241 = vmatmul.mubr.f32.gmra.mxu0 %v1174
        %v1242 = vpop.f32.mrf.mxu0
        %v1243 = vadd.f32 0.0, %v1242
        %v1244 = vpop.f32.mrf.mxu0
        %1245 = vdwg.mxu0
        %1246 = vrot.lane.b32.xlu0 %v371, 64
        %v1247 = vpop.permute.xlu0 %1246
        %v1250 = vsel %vm384, %v1088, 0
        %1252 = vmatprep.subr.mxu0 0.0
        %1253 = vmatpush1.msra.mxu0 0.0
        %1254 = vmatprep.subr.mxu0 0.0
        %1255 = vmatpush1.msra.mxu0 0.0
        %1256 = vmatprep.subr.mxu0 0.0
        %1257 = vmatpush1.msra.mxu0 0.0
        %1258 = vmatprep.subr.mxu0 0.0
        %1259 = vmatpush1.msra.mxu0 0.0
        %1260 = vmatprep.subr.mxu0 0.0
        %1261 = vmatpush1.msra.mxu0 0.0
        %1262 = vmatprep.subr.mxu0 0.0
        %1263 = vmatpush1.msra.mxu0 0.0
        %1264 = vmatprep.subr.mxu0 0.0
        %1265 = vmatpush1.msra.mxu0 0.0
        %1266 = vmatprep.subr.mxu0 0.0
        %1267 = vmatpush1.msra.mxu0 0.0
        %1268 = vmatprep.subr.mxu0 0.0
        %1269 = vmatpush1.msra.mxu0 0.0
        %1270 = vmatprep.subr.mxu0 0.0
        %1271 = vmatpush1.msra.mxu0 0.0
        %1272 = vmatprep.subr.mxu0 0.0
        %1273 = vmatpush1.msra.mxu0 0.0
        %1274 = vmatprep.subr.mxu0 0.0
        %1275 = vmatpush1.msra.mxu0 0.0
        %1276 = vmatprep.subr.mxu0 0.0
        %1277 = vmatpush1.msra.mxu0 0.0
        %1278 = vmatprep.subr.mxu0 0.0
        %1279 = vmatpush1.msra.mxu0 0.0
        %1280 = vmatprep.subr.mxu0 0.0
        %1281 = vmatpush1.msra.mxu0 0.0
        %1282 = vmatprep.subr.mxu0 0.0
        %1283 = vmatpush1.msra.mxu0 %v1247
        %1284 = vmatprep.subr.mxu0 0.0
        %1285 = vmatpush2.msra.mxu0 0.0
        %1286 = vmatprep.subr.mxu0 0.0
        %1287 = vmatpush2.msra.mxu0 0.0
        %1288 = vmatprep.subr.mxu0 0.0
        %1289 = vmatpush2.msra.mxu0 0.0
        %1290 = vmatprep.subr.mxu0 0.0
        %1291 = vmatpush2.msra.mxu0 0.0
        %1292 = vmatprep.subr.mxu0 0.0
        %1293 = vmatpush2.msra.mxu0 0.0
        %1294 = vmatprep.subr.mxu0 0.0
        %1295 = vmatpush2.msra.mxu0 0.0
        %1296 = vmatprep.subr.mxu0 0.0
        %1297 = vmatpush2.msra.mxu0 0.0
        %1298 = vmatprep.subr.mxu0 0.0
        %1299 = vmatpush2.msra.mxu0 0.0
        %1300 = vmatprep.subr.mxu0 0.0
        %1301 = vmatpush2.msra.mxu0 0.0
        %1302 = vmatprep.subr.mxu0 0.0
        %1303 = vmatpush2.msra.mxu0 0.0
        %1304 = vmatprep.subr.mxu0 0.0
        %1305 = vmatpush2.msra.mxu0 0.0
        %1306 = vmatprep.subr.mxu0 0.0
        %1307 = vmatpush2.msra.mxu0 0.0
        %1308 = vmatprep.subr.mxu0 0.0
        %1309 = vmatpush2.msra.mxu0 0.0
        %1310 = vmatprep.subr.mxu0 0.0
        %1311 = vmatpush2.msra.mxu0 0.0
        %1312 = vmatprep.subr.mxu0 0.0
        %1313 = vmatpush2.msra.mxu0 0.0
        %1314 = vmatprep.subr.mxu0 0.0
        %1315 = vmatpush2.msra.mxu0 0.0
        %1316 = vmatprep.mubr.f32.mxu0 0.0
        %1317 = vmatmul.mubr.f32.gmra.mxu0 %v1250
        %v1318 = vpop.f32.mrf.mxu0
        %v1319 = vadd.f32 0.0, %v1318
        %v1320 = vpop.f32.mrf.mxu0
        %1321 = vdwg.mxu0
        %1322 = vrot.lane.b32.xlu0 %v373, 64
        %v1323 = vpop.permute.xlu0 %1322
        %v1326 = vsel %vm384, %v1089, 0
        %1328 = vmatprep.subr.mxu0 0.0
        %1329 = vmatpush1.msra.mxu0 0.0
        %1330 = vmatprep.subr.mxu0 0.0
        %1331 = vmatpush1.msra.mxu0 0.0
        %1332 = vmatprep.subr.mxu0 0.0
        %1333 = vmatpush1.msra.mxu0 0.0
        %1334 = vmatprep.subr.mxu0 0.0
        %1335 = vmatpush1.msra.mxu0 0.0
        %1336 = vmatprep.subr.mxu0 0.0
        %1337 = vmatpush1.msra.mxu0 0.0
        %1338 = vmatprep.subr.mxu0 0.0
        %1339 = vmatpush1.msra.mxu0 0.0
        %1340 = vmatprep.subr.mxu0 0.0
        %1341 = vmatpush1.msra.mxu0 0.0
        %1342 = vmatprep.subr.mxu0 0.0
        %1343 = vmatpush1.msra.mxu0 0.0
        %1344 = vmatprep.subr.mxu0 0.0
        %1345 = vmatpush1.msra.mxu0 0.0
        %1346 = vmatprep.subr.mxu0 0.0
        %1347 = vmatpush1.msra.mxu0 0.0
        %1348 = vmatprep.subr.mxu0 0.0
        %1349 = vmatpush1.msra.mxu0 0.0
        %1350 = vmatprep.subr.mxu0 0.0
        %1351 = vmatpush1.msra.mxu0 0.0
        %1352 = vmatprep.subr.mxu0 0.0
        %1353 = vmatpush1.msra.mxu0 0.0
        %1354 = vmatprep.subr.mxu0 0.0
        %1355 = vmatpush1.msra.mxu0 0.0
        %1356 = vmatprep.subr.mxu0 0.0
        %1357 = vmatpush1.msra.mxu0 0.0
        %1358 = vmatprep.subr.mxu0 0.0
        %1359 = vmatpush1.msra.mxu0 %v1323
        %1360 = vmatprep.subr.mxu0 0.0
        %1361 = vmatpush2.msra.mxu0 0.0
        %1362 = vmatprep.subr.mxu0 0.0
        %1363 = vmatpush2.msra.mxu0 0.0
        %1364 = vmatprep.subr.mxu0 0.0
        %1365 = vmatpush2.msra.mxu0 0.0
        %1366 = vmatprep.subr.mxu0 0.0
        %1367 = vmatpush2.msra.mxu0 0.0
        %1368 = vmatprep.subr.mxu0 0.0
        %1369 = vmatpush2.msra.mxu0 0.0
        %1370 = vmatprep.subr.mxu0 0.0
        %1371 = vmatpush2.msra.mxu0 0.0
        %1372 = vmatprep.subr.mxu0 0.0
        %1373 = vmatpush2.msra.mxu0 0.0
        %1374 = vmatprep.subr.mxu0 0.0
        %1375 = vmatpush2.msra.mxu0 0.0
        %1376 = vmatprep.subr.mxu0 0.0
        %1377 = vmatpush2.msra.mxu0 0.0
        %1378 = vmatprep.subr.mxu0 0.0
        %1379 = vmatpush2.msra.mxu0 0.0
        %1380 = vmatprep.subr.mxu0 0.0
        %1381 = vmatpush2.msra.mxu0 0.0
        %1382 = vmatprep.subr.mxu0 0.0
        %1383 = vmatpush2.msra.mxu0 0.0
        %1384 = vmatprep.subr.mxu0 0.0
        %1385 = vmatpush2.msra.mxu0 0.0
        %1386 = vmatprep.subr.mxu0 0.0
        %1387 = vmatpush2.msra.mxu0 0.0
        %1388 = vmatprep.subr.mxu0 0.0
        %1389 = vmatpush2.msra.mxu0 0.0
        %1390 = vmatprep.subr.mxu0 0.0
        %1391 = vmatpush2.msra.mxu0 0.0
        %1392 = vmatprep.mubr.f32.mxu0 0.0
        %1393 = vmatmul.mubr.f32.gmra.mxu0 %v1326
        %v1394 = vpop.f32.mrf.mxu0
        %v1395 = vadd.f32 0.0, %v1394
        %v1396 = vpop.f32.mrf.mxu0
        %1397 = vdwg.mxu0
        %1398 = vrot.lane.b32.xlu0 %v375, 64
        %v1399 = vpop.permute.xlu0 %1398
        %v1402 = vsel %vm384, %v1090, 0
        %1404 = vmatprep.subr.mxu0 0.0
        %1405 = vmatpush1.msra.mxu0 0.0
        %1406 = vmatprep.subr.mxu0 0.0
        %1407 = vmatpush1.msra.mxu0 0.0
        %1408 = vmatprep.subr.mxu0 0.0
        %1409 = vmatpush1.msra.mxu0 0.0
        %1410 = vmatprep.subr.mxu0 0.0
        %1411 = vmatpush1.msra.mxu0 0.0
        %1412 = vmatprep.subr.mxu0 0.0
        %1413 = vmatpush1.msra.mxu0 0.0
        %1414 = vmatprep.subr.mxu0 0.0
        %1415 = vmatpush1.msra.mxu0 0.0
        %1416 = vmatprep.subr.mxu0 0.0
        %1417 = vmatpush1.msra.mxu0 0.0
        %1418 = vmatprep.subr.mxu0 0.0
        %1419 = vmatpush1.msra.mxu0 0.0
        %1420 = vmatprep.subr.mxu0 0.0
        %1421 = vmatpush1.msra.mxu0 0.0
        %1422 = vmatprep.subr.mxu0 0.0
        %1423 = vmatpush1.msra.mxu0 0.0
        %1424 = vmatprep.subr.mxu0 0.0
        %1425 = vmatpush1.msra.mxu0 0.0
        %1426 = vmatprep.subr.mxu0 0.0
        %1427 = vmatpush1.msra.mxu0 0.0
        %1428 = vmatprep.subr.mxu0 0.0
        %1429 = vmatpush1.msra.mxu0 0.0
        %1430 = vmatprep.subr.mxu0 0.0
        %1431 = vmatpush1.msra.mxu0 0.0
        %1432 = vmatprep.subr.mxu0 0.0
        %1433 = vmatpush1.msra.mxu0 0.0
        %1434 = vmatprep.subr.mxu0 0.0
        %1435 = vmatpush1.msra.mxu0 %v1399
        %1436 = vmatprep.subr.mxu0 0.0
        %1437 = vmatpush2.msra.mxu0 0.0
        %1438 = vmatprep.subr.mxu0 0.0
        %1439 = vmatpush2.msra.mxu0 0.0
        %1440 = vmatprep.subr.mxu0 0.0
        %1441 = vmatpush2.msra.mxu0 0.0
        %1442 = vmatprep.subr.mxu0 0.0
        %1443 = vmatpush2.msra.mxu0 0.0
        %1444 = vmatprep.subr.mxu0 0.0
        %1445 = vmatpush2.msra.mxu0 0.0
        %1446 = vmatprep.subr.mxu0 0.0
        %1447 = vmatpush2.msra.mxu0 0.0
        %1448 = vmatprep.subr.mxu0 0.0
        %1449 = vmatpush2.msra.mxu0 0.0
        %1450 = vmatprep.subr.mxu0 0.0
        %1451 = vmatpush2.msra.mxu0 0.0
        %1452 = vmatprep.subr.mxu0 0.0
        %1453 = vmatpush2.msra.mxu0 0.0
        %1454 = vmatprep.subr.mxu0 0.0
        %1455 = vmatpush2.msra.mxu0 0.0
        %1456 = vmatprep.subr.mxu0 0.0
        %1457 = vmatpush2.msra.mxu0 0.0
        %1458 = vmatprep.subr.mxu0 0.0
        %1459 = vmatpush2.msra.mxu0 0.0
        %1460 = vmatprep.subr.mxu0 0.0
        %1461 = vmatpush2.msra.mxu0 0.0
        %1462 = vmatprep.subr.mxu0 0.0
        %1463 = vmatpush2.msra.mxu0 0.0
        %1464 = vmatprep.subr.mxu0 0.0
        %1465 = vmatpush2.msra.mxu0 0.0
        %1466 = vmatprep.subr.mxu0 0.0
        %1467 = vmatpush2.msra.mxu0 0.0
        %1468 = vmatprep.mubr.f32.mxu0 0.0
        %1469 = vmatmul.mubr.f32.gmra.mxu0 %v1402
        %v1470 = vpop.f32.mrf.mxu0
        %v1471 = vadd.f32 0.0, %v1470
        %v1472 = vpop.f32.mrf.mxu0
        %1473 = vdwg.mxu0
        %1474 = vrot.lane.b32.xlu0 %v377, 64
        %v1475 = vpop.permute.xlu0 %1474
        %v1478 = vsel %vm384, %v1091, 0
        %1480 = vmatprep.subr.mxu0 0.0
        %1481 = vmatpush1.msra.mxu0 0.0
        %1482 = vmatprep.subr.mxu0 0.0
        %1483 = vmatpush1.msra.mxu0 0.0
        %1484 = vmatprep.subr.mxu0 0.0
        %1485 = vmatpush1.msra.mxu0 0.0
        %1486 = vmatprep.subr.mxu0 0.0
        %1487 = vmatpush1.msra.mxu0 0.0
        %1488 = vmatprep.subr.mxu0 0.0
        %1489 = vmatpush1.msra.mxu0 0.0
        %1490 = vmatprep.subr.mxu0 0.0
        %1491 = vmatpush1.msra.mxu0 0.0
        %1492 = vmatprep.subr.mxu0 0.0
        %1493 = vmatpush1.msra.mxu0 0.0
        %1494 = vmatprep.subr.mxu0 0.0
        %1495 = vmatpush1.msra.mxu0 0.0
        %1496 = vmatprep.subr.mxu0 0.0
        %1497 = vmatpush1.msra.mxu0 0.0
        %1498 = vmatprep.subr.mxu0 0.0
        %1499 = vmatpush1.msra.mxu0 0.0
        %1500 = vmatprep.subr.mxu0 0.0
        %1501 = vmatpush1.msra.mxu0 0.0
        %1502 = vmatprep.subr.mxu0 0.0
        %1503 = vmatpush1.msra.mxu0 0.0
        %1504 = vmatprep.subr.mxu0 0.0
        %1505 = vmatpush1.msra.mxu0 0.0
        %1506 = vmatprep.subr.mxu0 0.0
        %1507 = vmatpush1.msra.mxu0 0.0
        %1508 = vmatprep.subr.mxu0 0.0
        %1509 = vmatpush1.msra.mxu0 0.0
        %1510 = vmatprep.subr.mxu0 0.0
        %1511 = vmatpush1.msra.mxu0 %v1475
        %1512 = vmatprep.subr.mxu0 0.0
        %1513 = vmatpush2.msra.mxu0 0.0
        %1514 = vmatprep.subr.mxu0 0.0
        %1515 = vmatpush2.msra.mxu0 0.0
        %1516 = vmatprep.subr.mxu0 0.0
        %1517 = vmatpush2.msra.mxu0 0.0
        %1518 = vmatprep.subr.mxu0 0.0
        %1519 = vmatpush2.msra.mxu0 0.0
        %1520 = vmatprep.subr.mxu0 0.0
        %1521 = vmatpush2.msra.mxu0 0.0
        %1522 = vmatprep.subr.mxu0 0.0
        %1523 = vmatpush2.msra.mxu0 0.0
        %1524 = vmatprep.subr.mxu0 0.0
        %1525 = vmatpush2.msra.mxu0 0.0
        %1526 = vmatprep.subr.mxu0 0.0
        %1527 = vmatpush2.msra.mxu0 0.0
        %1528 = vmatprep.subr.mxu0 0.0
        %1529 = vmatpush2.msra.mxu0 0.0
        %1530 = vmatprep.subr.mxu0 0.0
        %1531 = vmatpush2.msra.mxu0 0.0
        %1532 = vmatprep.subr.mxu0 0.0
        %1533 = vmatpush2.msra.mxu0 0.0
        %1534 = vmatprep.subr.mxu0 0.0
        %1535 = vmatpush2.msra.mxu0 0.0
        %1536 = vmatprep.subr.mxu0 0.0
        %1537 = vmatpush2.msra.mxu0 0.0
        %1538 = vmatprep.subr.mxu0 0.0
        %1539 = vmatpush2.msra.mxu0 0.0
        %1540 = vmatprep.subr.mxu0 0.0
        %1541 = vmatpush2.msra.mxu0 0.0
        %1542 = vmatprep.subr.mxu0 0.0
        %1543 = vmatpush2.msra.mxu0 0.0
        %1544 = vmatprep.mubr.f32.mxu0 0.0
        %1545 = vmatmul.mubr.f32.gmra.mxu0 %v1478
        %v1546 = vpop.f32.mrf.mxu0
        %v1547 = vadd.f32 0.0, %v1546
        %v1548 = vpop.f32.mrf.mxu0
        %1549 = vdwg.mxu0
        %1550 = vrot.lane.b32.xlu0 %v379, 64
        %v1551 = vpop.permute.xlu0 %1550
        %v1554 = vsel %vm384, %v1092, 0
        %1556 = vmatprep.subr.mxu0 0.0
        %1557 = vmatpush1.msra.mxu0 0.0
        %1558 = vmatprep.subr.mxu0 0.0
        %1559 = vmatpush1.msra.mxu0 0.0
        %1560 = vmatprep.subr.mxu0 0.0
        %1561 = vmatpush1.msra.mxu0 0.0
        %1562 = vmatprep.subr.mxu0 0.0
        %1563 = vmatpush1.msra.mxu0 0.0
        %1564 = vmatprep.subr.mxu0 0.0
        %1565 = vmatpush1.msra.mxu0 0.0
        %1566 = vmatprep.subr.mxu0 0.0
        %1567 = vmatpush1.msra.mxu0 0.0
        %1568 = vmatprep.subr.mxu0 0.0
        %1569 = vmatpush1.msra.mxu0 0.0
        %1570 = vmatprep.subr.mxu0 0.0
        %1571 = vmatpush1.msra.mxu0 0.0
        %1572 = vmatprep.subr.mxu0 0.0
        %1573 = vmatpush1.msra.mxu0 0.0
        %1574 = vmatprep.subr.mxu0 0.0
        %1575 = vmatpush1.msra.mxu0 0.0
        %1576 = vmatprep.subr.mxu0 0.0
        %1577 = vmatpush1.msra.mxu0 0.0
        %1578 = vmatprep.subr.mxu0 0.0
        %1579 = vmatpush1.msra.mxu0 0.0
        %1580 = vmatprep.subr.mxu0 0.0
        %1581 = vmatpush1.msra.mxu0 0.0
        %1582 = vmatprep.subr.mxu0 0.0
        %1583 = vmatpush1.msra.mxu0 0.0
        %1584 = vmatprep.subr.mxu0 0.0
        %1585 = vmatpush1.msra.mxu0 0.0
        %1586 = vmatprep.subr.mxu0 0.0
        %1587 = vmatpush1.msra.mxu0 %v1551
        %1588 = vmatprep.subr.mxu0 0.0
        %1589 = vmatpush2.msra.mxu0 0.0
        %1590 = vmatprep.subr.mxu0 0.0
        %1591 = vmatpush2.msra.mxu0 0.0
        %1592 = vmatprep.subr.mxu0 0.0
        %1593 = vmatpush2.msra.mxu0 0.0
        %1594 = vmatprep.subr.mxu0 0.0
        %1595 = vmatpush2.msra.mxu0 0.0
        %1596 = vmatprep.subr.mxu0 0.0
        %1597 = vmatpush2.msra.mxu0 0.0
        %1598 = vmatprep.subr.mxu0 0.0
        %1599 = vmatpush2.msra.mxu0 0.0
        %1600 = vmatprep.subr.mxu0 0.0
        %1601 = vmatpush2.msra.mxu0 0.0
        %1602 = vmatprep.subr.mxu0 0.0
        %1603 = vmatpush2.msra.mxu0 0.0
        %1604 = vmatprep.subr.mxu0 0.0
        %1605 = vmatpush2.msra.mxu0 0.0
        %1606 = vmatprep.subr.mxu0 0.0
        %1607 = vmatpush2.msra.mxu0 0.0
        %1608 = vmatprep.subr.mxu0 0.0
        %1609 = vmatpush2.msra.mxu0 0.0
        %1610 = vmatprep.subr.mxu0 0.0
        %1611 = vmatpush2.msra.mxu0 0.0
        %1612 = vmatprep.subr.mxu0 0.0
        %1613 = vmatpush2.msra.mxu0 0.0
        %1614 = vmatprep.subr.mxu0 0.0
        %1615 = vmatpush2.msra.mxu0 0.0
        %1616 = vmatprep.subr.mxu0 0.0
        %1617 = vmatpush2.msra.mxu0 0.0
        %1618 = vmatprep.subr.mxu0 0.0
        %1619 = vmatpush2.msra.mxu0 0.0
        %1620 = vmatprep.mubr.f32.mxu0 0.0
        %1621 = vmatmul.mubr.f32.gmra.mxu0 %v1554
        %v1622 = vpop.f32.mrf.mxu0
        %v1623 = vadd.f32 0.0, %v1622
        %v1624 = vpop.f32.mrf.mxu0
        %1625 = vdwg.mxu0
        %1626 = vrot.lane.b32.xlu0 %v381, 64
        %v1627 = vpop.permute.xlu0 %1626
        %v1630 = vsel %vm384, %v1093, 0
        %1632 = vmatprep.subr.mxu0 0.0
        %1633 = vmatpush1.msra.mxu0 0.0
        %1634 = vmatprep.subr.mxu0 0.0
        %1635 = vmatpush1.msra.mxu0 0.0
        %1636 = vmatprep.subr.mxu0 0.0
        %1637 = vmatpush1.msra.mxu0 0.0
        %1638 = vmatprep.subr.mxu0 0.0
        %1639 = vmatpush1.msra.mxu0 0.0
        %1640 = vmatprep.subr.mxu0 0.0
        %1641 = vmatpush1.msra.mxu0 0.0
        %1642 = vmatprep.subr.mxu0 0.0
        %1643 = vmatpush1.msra.mxu0 0.0
        %1644 = vmatprep.subr.mxu0 0.0
        %1645 = vmatpush1.msra.mxu0 0.0
        %1646 = vmatprep.subr.mxu0 0.0
        %1647 = vmatpush1.msra.mxu0 0.0
        %1648 = vmatprep.subr.mxu0 0.0
        %1649 = vmatpush1.msra.mxu0 0.0
        %1650 = vmatprep.subr.mxu0 0.0
        %1651 = vmatpush1.msra.mxu0 0.0
        %1652 = vmatprep.subr.mxu0 0.0
        %1653 = vmatpush1.msra.mxu0 0.0
        %1654 = vmatprep.subr.mxu0 0.0
        %1655 = vmatpush1.msra.mxu0 0.0
        %1656 = vmatprep.subr.mxu0 0.0
        %1657 = vmatpush1.msra.mxu0 0.0
        %1658 = vmatprep.subr.mxu0 0.0
        %1659 = vmatpush1.msra.mxu0 0.0
        %1660 = vmatprep.subr.mxu0 0.0
        %1661 = vmatpush1.msra.mxu0 0.0
        %1662 = vmatprep.subr.mxu0 0.0
        %1663 = vmatpush1.msra.mxu0 %v1627
        %1664 = vmatprep.subr.mxu0 0.0
        %1665 = vmatpush2.msra.mxu0 0.0
        %1666 = vmatprep.subr.mxu0 0.0
        %1667 = vmatpush2.msra.mxu0 0.0
        %1668 = vmatprep.subr.mxu0 0.0
        %1669 = vmatpush2.msra.mxu0 0.0
        %1670 = vmatprep.subr.mxu0 0.0
        %1671 = vmatpush2.msra.mxu0 0.0
        %1672 = vmatprep.subr.mxu0 0.0
        %1673 = vmatpush2.msra.mxu0 0.0
        %1674 = vmatprep.subr.mxu0 0.0
        %1675 = vmatpush2.msra.mxu0 0.0
        %1676 = vmatprep.subr.mxu0 0.0
        %1677 = vmatpush2.msra.mxu0 0.0
        %1678 = vmatprep.subr.mxu0 0.0
        %1679 = vmatpush2.msra.mxu0 0.0
        %1680 = vmatprep.subr.mxu0 0.0
        %1681 = vmatpush2.msra.mxu0 0.0
        %1682 = vmatprep.subr.mxu0 0.0
        %1683 = vmatpush2.msra.mxu0 0.0
        %1684 = vmatprep.subr.mxu0 0.0
        %1685 = vmatpush2.msra.mxu0 0.0
        %1686 = vmatprep.subr.mxu0 0.0
        %1687 = vmatpush2.msra.mxu0 0.0
        %1688 = vmatprep.subr.mxu0 0.0
        %1689 = vmatpush2.msra.mxu0 0.0
        %1690 = vmatprep.subr.mxu0 0.0
        %1691 = vmatpush2.msra.mxu0 0.0
        %1692 = vmatprep.subr.mxu0 0.0
        %1693 = vmatpush2.msra.mxu0 0.0
        %1694 = vmatprep.subr.mxu0 0.0
        %1695 = vmatpush2.msra.mxu0 0.0
        %1696 = vmatprep.mubr.f32.mxu0 0.0
        %1697 = vmatmul.mubr.f32.gmra.mxu0 %v1630
        %v1698 = vpop.f32.mrf.mxu0
        %v1699 = vadd.f32 0.0, %v1698
        %v1700 = vpop.f32.mrf.mxu0
        %1701 = vdwg.mxu0
        %v1702 = vld [vmem:[#allocation7] sm:$0xff]
        %v1703 = vld [vmem:[#allocation7 + $0x8] sm:$0xff]
        %v1704 = vld [vmem:[#allocation7 + $0x10] sm:$0xff]
        %v1705 = vld [vmem:[#allocation7 + $0x18] sm:$0xff]
        %v1707 = vsel %vm384, %v1167, 0
        %v1710 = vsel %vm384, %v1243, 0
        %1712 = vmatprep.subr.mxu0 0.0
        %1713 = vmatpush1.msra.mxu0 0.0
        %1714 = vmatprep.subr.mxu0 0.0
        %1715 = vmatpush1.msra.mxu0 0.0
        %1716 = vmatprep.subr.mxu0 0.0
        %1717 = vmatpush1.msra.mxu0 0.0
        %1718 = vmatprep.subr.mxu0 0.0
        %1719 = vmatpush1.msra.mxu0 0.0
        %1720 = vmatprep.subr.mxu0 0.0
        %1721 = vmatpush1.msra.mxu0 0.0
        %1722 = vmatprep.subr.mxu0 0.0
        %1723 = vmatpush1.msra.mxu0 0.0
        %1724 = vmatprep.subr.mxu0 0.0
        %1725 = vmatpush1.msra.mxu0 0.0
        %1726 = vmatprep.subr.mxu0 0.0
        %1727 = vmatpush1.msra.mxu0 0.0
        %1728 = vmatprep.subr.mxu0 0.0
        %1729 = vmatpush1.msra.mxu0 0.0
        %1730 = vmatprep.subr.mxu0 0.0
        %1731 = vmatpush1.msra.mxu0 0.0
        %1732 = vmatprep.subr.mxu0 0.0
        %1733 = vmatpush1.msra.mxu0 0.0
        %1734 = vmatprep.subr.mxu0 0.0
        %1735 = vmatpush1.msra.mxu0 0.0
        %1736 = vmatprep.subr.mxu0 0.0
        %1737 = vmatpush1.msra.mxu0 0.0
        %1738 = vmatprep.subr.mxu0 0.0
        %1739 = vmatpush1.msra.mxu0 0.0
        %1740 = vmatprep.subr.mxu0 0.0
        %1741 = vmatpush1.msra.mxu0 0.0
        %1742 = vmatprep.subr.mxu0 0.0
        %1743 = vmatpush1.msra.mxu0 %v1702
        %1744 = vmatprep.subr.mxu0 0.0
        %1745 = vmatpush2.msra.mxu0 0.0
        %1746 = vmatprep.subr.mxu0 0.0
        %1747 = vmatpush2.msra.mxu0 0.0
        %1748 = vmatprep.subr.mxu0 0.0
        %1749 = vmatpush2.msra.mxu0 0.0
        %1750 = vmatprep.subr.mxu0 0.0
        %1751 = vmatpush2.msra.mxu0 0.0
        %1752 = vmatprep.subr.mxu0 0.0
        %1753 = vmatpush2.msra.mxu0 0.0
        %1754 = vmatprep.subr.mxu0 0.0
        %1755 = vmatpush2.msra.mxu0 0.0
        %1756 = vmatprep.subr.mxu0 0.0
        %1757 = vmatpush2.msra.mxu0 0.0
        %1758 = vmatprep.subr.mxu0 0.0
        %1759 = vmatpush2.msra.mxu0 0.0
        %1760 = vmatprep.subr.mxu0 0.0
        %1761 = vmatpush2.msra.mxu0 0.0
        %1762 = vmatprep.subr.mxu0 0.0
        %1763 = vmatpush2.msra.mxu0 0.0
        %1764 = vmatprep.subr.mxu0 0.0
        %1765 = vmatpush2.msra.mxu0 0.0
        %1766 = vmatprep.subr.mxu0 0.0
        %1767 = vmatpush2.msra.mxu0 0.0
        %1768 = vmatprep.subr.mxu0 0.0
        %1769 = vmatpush2.msra.mxu0 0.0
        %1770 = vmatprep.subr.mxu0 0.0
        %1771 = vmatpush2.msra.mxu0 0.0
        %1772 = vmatprep.subr.mxu0 0.0
        %1773 = vmatpush2.msra.mxu0 0.0
        %1774 = vmatprep.subr.mxu0 0.0
        %1775 = vmatpush2.msra.mxu0 0.0
        %1776 = vmatprep.mubr.f32.mxu0 0.0
        %1777 = vmatmul.mubr.f32.gmra.mxu0 %v1707
        %v1778 = vpop.f32.mrf.mxu0
        %v1779 = vadd.f32 0.0, %v1778
        %v1780 = vpop.f32.mrf.mxu0
        %1781 = vmatprep.mubr.f32.mxu0 0.0
        %1782 = vmatmul.mubr.f32.gmra.mxu0 %v1710
        %v1783 = vpop.f32.mrf.mxu0
        %v1784 = vadd.f32 0.0, %v1783
        %v1785 = vpop.f32.mrf.mxu0
        %1786 = vdwg.mxu0
        %v1788 = vsel %vm384, %v1319, 0
        %v1791 = vsel %vm384, %v1395, 0
        %1793 = vmatprep.subr.mxu0 0.0
        %1794 = vmatpush1.msra.mxu0 0.0
        %1795 = vmatprep.subr.mxu0 0.0
        %1796 = vmatpush1.msra.mxu0 0.0
        %1797 = vmatprep.subr.mxu0 0.0
        %1798 = vmatpush1.msra.mxu0 0.0
        %1799 = vmatprep.subr.mxu0 0.0
        %1800 = vmatpush1.msra.mxu0 0.0
        %1801 = vmatprep.subr.mxu0 0.0
        %1802 = vmatpush1.msra.mxu0 0.0
        %1803 = vmatprep.subr.mxu0 0.0
        %1804 = vmatpush1.msra.mxu0 0.0
        %1805 = vmatprep.subr.mxu0 0.0
        %1806 = vmatpush1.msra.mxu0 0.0
        %1807 = vmatprep.subr.mxu0 0.0
        %1808 = vmatpush1.msra.mxu0 0.0
        %1809 = vmatprep.subr.mxu0 0.0
        %1810 = vmatpush1.msra.mxu0 0.0
        %1811 = vmatprep.subr.mxu0 0.0
        %1812 = vmatpush1.msra.mxu0 0.0
        %1813 = vmatprep.subr.mxu0 0.0
        %1814 = vmatpush1.msra.mxu0 0.0
        %1815 = vmatprep.subr.mxu0 0.0
        %1816 = vmatpush1.msra.mxu0 0.0
        %1817 = vmatprep.subr.mxu0 0.0
        %1818 = vmatpush1.msra.mxu0 0.0
        %1819 = vmatprep.subr.mxu0 0.0
        %1820 = vmatpush1.msra.mxu0 0.0
        %1821 = vmatprep.subr.mxu0 0.0
        %1822 = vmatpush1.msra.mxu0 0.0
        %1823 = vmatprep.subr.mxu0 0.0
        %1824 = vmatpush1.msra.mxu0 %v1703
        %1825 = vmatprep.subr.mxu0 0.0
        %1826 = vmatpush2.msra.mxu0 0.0
        %1827 = vmatprep.subr.mxu0 0.0
        %1828 = vmatpush2.msra.mxu0 0.0
        %1829 = vmatprep.subr.mxu0 0.0
        %1830 = vmatpush2.msra.mxu0 0.0
        %1831 = vmatprep.subr.mxu0 0.0
        %1832 = vmatpush2.msra.mxu0 0.0
        %1833 = vmatprep.subr.mxu0 0.0
        %1834 = vmatpush2.msra.mxu0 0.0
        %1835 = vmatprep.subr.mxu0 0.0
        %1836 = vmatpush2.msra.mxu0 0.0
        %1837 = vmatprep.subr.mxu0 0.0
        %1838 = vmatpush2.msra.mxu0 0.0
        %1839 = vmatprep.subr.mxu0 0.0
        %1840 = vmatpush2.msra.mxu0 0.0
        %1841 = vmatprep.subr.mxu0 0.0
        %1842 = vmatpush2.msra.mxu0 0.0
        %1843 = vmatprep.subr.mxu0 0.0
        %1844 = vmatpush2.msra.mxu0 0.0
        %1845 = vmatprep.subr.mxu0 0.0
        %1846 = vmatpush2.msra.mxu0 0.0
        %1847 = vmatprep.subr.mxu0 0.0
        %1848 = vmatpush2.msra.mxu0 0.0
        %1849 = vmatprep.subr.mxu0 0.0
        %1850 = vmatpush2.msra.mxu0 0.0
        %1851 = vmatprep.subr.mxu0 0.0
        %1852 = vmatpush2.msra.mxu0 0.0
        %1853 = vmatprep.subr.mxu0 0.0
        %1854 = vmatpush2.msra.mxu0 0.0
        %1855 = vmatprep.subr.mxu0 0.0
        %1856 = vmatpush2.msra.mxu0 0.0
        %1857 = vmatprep.mubr.f32.mxu0 0.0
        %1858 = vmatmul.mubr.f32.gmra.mxu0 %v1788
        %v1859 = vpop.f32.mrf.mxu0
        %v1860 = vadd.f32 0.0, %v1859
        %v1861 = vpop.f32.mrf.mxu0
        %1862 = vmatprep.mubr.f32.mxu0 0.0
        %1863 = vmatmul.mubr.f32.gmra.mxu0 %v1791
        %v1864 = vpop.f32.mrf.mxu0
        %v1865 = vadd.f32 0.0, %v1864
        %v1866 = vpop.f32.mrf.mxu0
        %1867 = vdwg.mxu0
        %v1869 = vsel %vm384, %v1471, 0
        %v1872 = vsel %vm384, %v1547, 0
        %1874 = vmatprep.subr.mxu0 0.0
        %1875 = vmatpush1.msra.mxu0 0.0
        %1876 = vmatprep.subr.mxu0 0.0
        %1877 = vmatpush1.msra.mxu0 0.0
        %1878 = vmatprep.subr.mxu0 0.0
        %1879 = vmatpush1.msra.mxu0 0.0
        %1880 = vmatprep.subr.mxu0 0.0
        %1881 = vmatpush1.msra.mxu0 0.0
        %1882 = vmatprep.subr.mxu0 0.0
        %1883 = vmatpush1.msra.mxu0 0.0
        %1884 = vmatprep.subr.mxu0 0.0
        %1885 = vmatpush1.msra.mxu0 0.0
        %1886 = vmatprep.subr.mxu0 0.0
        %1887 = vmatpush1.msra.mxu0 0.0
        %1888 = vmatprep.subr.mxu0 0.0
        %1889 = vmatpush1.msra.mxu0 0.0
        %1890 = vmatprep.subr.mxu0 0.0
        %1891 = vmatpush1.msra.mxu0 0.0
        %1892 = vmatprep.subr.mxu0 0.0
        %1893 = vmatpush1.msra.mxu0 0.0
        %1894 = vmatprep.subr.mxu0 0.0
        %1895 = vmatpush1.msra.mxu0 0.0
        %1896 = vmatprep.subr.mxu0 0.0
        %1897 = vmatpush1.msra.mxu0 0.0
        %1898 = vmatprep.subr.mxu0 0.0
        %1899 = vmatpush1.msra.mxu0 0.0
        %1900 = vmatprep.subr.mxu0 0.0
        %1901 = vmatpush1.msra.mxu0 0.0
        %1902 = vmatprep.subr.mxu0 0.0
        %1903 = vmatpush1.msra.mxu0 0.0
        %1904 = vmatprep.subr.mxu0 0.0
        %1905 = vmatpush1.msra.mxu0 %v1704
        %1906 = vmatprep.subr.mxu0 0.0
        %1907 = vmatpush2.msra.mxu0 0.0
        %1908 = vmatprep.subr.mxu0 0.0
        %1909 = vmatpush2.msra.mxu0 0.0
        %1910 = vmatprep.subr.mxu0 0.0
        %1911 = vmatpush2.msra.mxu0 0.0
        %1912 = vmatprep.subr.mxu0 0.0
        %1913 = vmatpush2.msra.mxu0 0.0
        %1914 = vmatprep.subr.mxu0 0.0
        %1915 = vmatpush2.msra.mxu0 0.0
        %1916 = vmatprep.subr.mxu0 0.0
        %1917 = vmatpush2.msra.mxu0 0.0
        %1918 = vmatprep.subr.mxu0 0.0
        %1919 = vmatpush2.msra.mxu0 0.0
        %1920 = vmatprep.subr.mxu0 0.0
        %1921 = vmatpush2.msra.mxu0 0.0
        %1922 = vmatprep.subr.mxu0 0.0
        %1923 = vmatpush2.msra.mxu0 0.0
        %1924 = vmatprep.subr.mxu0 0.0
        %1925 = vmatpush2.msra.mxu0 0.0
        %1926 = vmatprep.subr.mxu0 0.0
        %1927 = vmatpush2.msra.mxu0 0.0
        %1928 = vmatprep.subr.mxu0 0.0
        %1929 = vmatpush2.msra.mxu0 0.0
        %1930 = vmatprep.subr.mxu0 0.0
        %1931 = vmatpush2.msra.mxu0 0.0
        %1932 = vmatprep.subr.mxu0 0.0
        %1933 = vmatpush2.msra.mxu0 0.0
        %1934 = vmatprep.subr.mxu0 0.0
        %1935 = vmatpush2.msra.mxu0 0.0
        %1936 = vmatprep.subr.mxu0 0.0
        %1937 = vmatpush2.msra.mxu0 0.0
        %1938 = vmatprep.mubr.f32.mxu0 0.0
        %1939 = vmatmul.mubr.f32.gmra.mxu0 %v1869
        %v1940 = vpop.f32.mrf.mxu0
        %v1941 = vadd.f32 0.0, %v1940
        %v1942 = vpop.f32.mrf.mxu0
        %1943 = vmatprep.mubr.f32.mxu0 0.0
        %1944 = vmatmul.mubr.f32.gmra.mxu0 %v1872
        %v1945 = vpop.f32.mrf.mxu0
        %v1946 = vadd.f32 0.0, %v1945
        %v1947 = vpop.f32.mrf.mxu0
        %1948 = vdwg.mxu0
        %v1950 = vsel %vm384, %v1623, 0
        %v1953 = vsel %vm384, %v1699, 0
        %1955 = vmatprep.subr.mxu0 0.0
        %1956 = vmatpush1.msra.mxu0 0.0
        %1957 = vmatprep.subr.mxu0 0.0
        %1958 = vmatpush1.msra.mxu0 0.0
        %1959 = vmatprep.subr.mxu0 0.0
        %1960 = vmatpush1.msra.mxu0 0.0
        %1961 = vmatprep.subr.mxu0 0.0
        %1962 = vmatpush1.msra.mxu0 0.0
        %1963 = vmatprep.subr.mxu0 0.0
        %1964 = vmatpush1.msra.mxu0 0.0
        %1965 = vmatprep.subr.mxu0 0.0
        %1966 = vmatpush1.msra.mxu0 0.0
        %1967 = vmatprep.subr.mxu0 0.0
        %1968 = vmatpush1.msra.mxu0 0.0
        %1969 = vmatprep.subr.mxu0 0.0
        %1970 = vmatpush1.msra.mxu0 0.0
        %1971 = vmatprep.subr.mxu0 0.0
        %1972 = vmatpush1.msra.mxu0 0.0
        %1973 = vmatprep.subr.mxu0 0.0
        %1974 = vmatpush1.msra.mxu0 0.0
        %1975 = vmatprep.subr.mxu0 0.0
        %1976 = vmatpush1.msra.mxu0 0.0
        %1977 = vmatprep.subr.mxu0 0.0
        %1978 = vmatpush1.msra.mxu0 0.0
        %1979 = vmatprep.subr.mxu0 0.0
        %1980 = vmatpush1.msra.mxu0 0.0
        %1981 = vmatprep.subr.mxu0 0.0
        %1982 = vmatpush1.msra.mxu0 0.0
        %1983 = vmatprep.subr.mxu0 0.0
        %1984 = vmatpush1.msra.mxu0 0.0
        %1985 = vmatprep.subr.mxu0 0.0
        %1986 = vmatpush1.msra.mxu0 %v1705
        %1987 = vmatprep.subr.mxu0 0.0
        %1988 = vmatpush2.msra.mxu0 0.0
        %1989 = vmatprep.subr.mxu0 0.0
        %1990 = vmatpush2.msra.mxu0 0.0
        %1991 = vmatprep.subr.mxu0 0.0
        %1992 = vmatpush2.msra.mxu0 0.0
        %1993 = vmatprep.subr.mxu0 0.0
        %1994 = vmatpush2.msra.mxu0 0.0
        %1995 = vmatprep.subr.mxu0 0.0
        %1996 = vmatpush2.msra.mxu0 0.0
        %1997 = vmatprep.subr.mxu0 0.0
        %1998 = vmatpush2.msra.mxu0 0.0
        %1999 = vmatprep.subr.mxu0 0.0
        %2000 = vmatpush2.msra.mxu0 0.0
        %2001 = vmatprep.subr.mxu0 0.0
        %2002 = vmatpush2.msra.mxu0 0.0
        %2003 = vmatprep.subr.mxu0 0.0
        %2004 = vmatpush2.msra.mxu0 0.0
        %2005 = vmatprep.subr.mxu0 0.0
        %2006 = vmatpush2.msra.mxu0 0.0
        %2007 = vmatprep.subr.mxu0 0.0
        %2008 = vmatpush2.msra.mxu0 0.0
        %2009 = vmatprep.subr.mxu0 0.0
        %2010 = vmatpush2.msra.mxu0 0.0
        %2011 = vmatprep.subr.mxu0 0.0
        %2012 = vmatpush2.msra.mxu0 0.0
        %2013 = vmatprep.subr.mxu0 0.0
        %2014 = vmatpush2.msra.mxu0 0.0
        %2015 = vmatprep.subr.mxu0 0.0
        %2016 = vmatpush2.msra.mxu0 0.0
        %2017 = vmatprep.subr.mxu0 0.0
        %2018 = vmatpush2.msra.mxu0 0.0
        %2019 = vmatprep.mubr.f32.mxu0 0.0
        %2020 = vmatmul.mubr.f32.gmra.mxu0 %v1950
        %v2021 = vpop.f32.mrf.mxu0
        %v2022 = vadd.f32 0.0, %v2021
        %v2023 = vpop.f32.mrf.mxu0
        %2024 = vmatprep.mubr.f32.mxu0 0.0
        %2025 = vmatmul.mubr.f32.gmra.mxu0 %v1953
        %v2026 = vpop.f32.mrf.mxu0
        %v2027 = vadd.f32 0.0, %v2026
        %v2028 = vpop.f32.mrf.mxu0
        %2029 = vdwg.mxu0
        %v2030 = vsel %vm286, %v1779, 0.0
        %v2031 = vsel %vm286, %v1860, 0.0
        %v2032 = vadd.f32 %v2030, %v2031
        %v2033 = vsel %vm286, %v1941, 0.0
        %v2034 = vadd.f32 %v2032, %v2033
        %v2035 = vsel %vm286, %v2022, 0.0
        %v2036 = vadd.f32 %v2034, %v2035
        %v2037 = vsel %vm286, %v1784, 0.0
        %v2038 = vsel %vm286, %v1865, 0.0
        %v2039 = vadd.f32 %v2037, %v2038
        %v2040 = vsel %vm286, %v1946, 0.0
        %v2041 = vadd.f32 %v2039, %v2040
        %v2042 = vsel %vm286, %v2027, 0.0
        %v2043 = vadd.f32 %v2041, %v2042
        %v2044 = vld [vmem:[%s4] sm:$0x1]
        %v2046 = vlaneseq
        %v2047 = vshrl.u32 %v2046, 7
        %v2048 = vsub.s32 0, %v2047
        %v2049 = vrot.slane %v2044, %v2048
        %v2051 = vadd.f32 %v2036, %v2049
        %v2052 = vadd.f32 %v2043, %v2049
        %v2055 = vrot.slane %v2051, 1
        %v2056 = vrot.slane %v2052, 1
        %2057 = vrot.lane.b32.xlu0 %v2055, 32
        %v2058 = vpop.permute.xlu0 %2057
        %2059 = vrot.lane.b32.xlu0 %v2056, 32
        %v2060 = vpop.permute.xlu0 %2059
        %v2063 = vrot.slane %v2051, 2
        %v2064 = vrot.slane %v2052, 2
        %2065 = vrot.lane.b32.xlu0 %v2063, 64
        %v2066 = vpop.permute.xlu0 %2065
        %2067 = vrot.lane.b32.xlu0 %v2064, 64
        %v2068 = vpop.permute.xlu0 %2067
        %v2071 = vrot.slane %v2051, 3
        %v2072 = vrot.slane %v2052, 3
        %2073 = vrot.lane.b32.xlu0 %v2071, 96
        %v2074 = vpop.permute.xlu0 %2073
        %2075 = vrot.lane.b32.xlu0 %v2072, 96
        %v2076 = vpop.permute.xlu0 %2075
        %v2079 = vrot.slane %v2051, 4
        %v2080 = vrot.slane %v2052, 4
        %v2083 = vrot.slane %v2051, 5
        %v2084 = vrot.slane %v2052, 5
        %2085 = vrot.lane.b32.xlu0 %v2083, 32
        %v2086 = vpop.permute.xlu0 %2085
        %2087 = vrot.lane.b32.xlu0 %v2084, 32
        %v2088 = vpop.permute.xlu0 %2087
        %v2091 = vrot.slane %v2051, 6
        %v2092 = vrot.slane %v2052, 6
        %2093 = vrot.lane.b32.xlu0 %v2091, 64
        %v2094 = vpop.permute.xlu0 %2093
        %2095 = vrot.lane.b32.xlu0 %v2092, 64
        %v2096 = vpop.permute.xlu0 %2095
        %v2099 = vrot.slane %v2051, 7
        %v2100 = vrot.slane %v2052, 7
        %2101 = vrot.lane.b32.xlu0 %v2099, 96
        %v2102 = vpop.permute.xlu0 %2101
        %2103 = vrot.lane.b32.xlu0 %v2100, 96
        %v2104 = vpop.permute.xlu0 %2103
        %v2107 = vsel %vm286, %v2051, %v2058
        %v2108 = vsel %vm286, %v2052, %v2060
        %vm2109 = vcmask 523264
        %v2110 = vsel %vm2109, %v2107, %v2066
        %v2111 = vsel %vm2109, %v2108, %v2068
        %vm2112 = vcmask 785408
        %v2113 = vsel %vm2112, %v2110, %v2074
        %v2114 = vsel %vm2112, %v2111, %v2076
        %v2115 = vsel %vm286, %v2079, %v2086
        %v2116 = vsel %vm286, %v2080, %v2088
        %v2117 = vsel %vm2109, %v2115, %v2094
        %v2118 = vsel %vm2109, %v2116, %v2096
        %v2119 = vsel %vm2112, %v2117, %v2102
        %v2120 = vsel %vm2112, %v2118, %v2104
        %v2125 = vcombine.low %v2113, %v2119
        %v2127 = vunpack.c.l.s4 1966171168
        %v2128 = vunpack.c.0.s8 %v2127
        %v2129 = vlaneseq
        %v2130 = vshrl.u32 %v2129, 7
        %v2131 = vsub.s32 %v2128, %v2130
        %v2132 = vrot.slane %v2125, %v2131
        %v2134 = vunpack.c.l.s4 1966171168
        %v2135 = vunpack.c.0.s8 %v2134
        %v2136 = vlaneseq
        %v2137 = vshrl.u32 %v2136, 7
        %v2138 = vsub.s32 %v2135, %v2137
        %v2139 = vrot.slane %v2132, %v2138
        %v2140 = vcombine.low %v2114, %v2120
        %v2142 = vunpack.c.l.s4 1966171168
        %v2143 = vunpack.c.0.s8 %v2142
        %v2144 = vlaneseq
        %v2145 = vshrl.u32 %v2144, 7
        %v2146 = vsub.s32 %v2143, %v2145
        %v2147 = vrot.slane %v2140, %v2146
        %v2149 = vunpack.c.l.s4 1966171168
        %v2150 = vunpack.c.0.s8 %v2149
        %v2151 = vlaneseq
        %v2152 = vshrl.u32 %v2151, 7
        %v2153 = vsub.s32 %v2150, %v2152
        %v2154 = vrot.slane %v2147, %v2153
        %v2157 = vlaneseq
        %vm2158 = vcmp.ge.s32.totalorder %v2157, 0
        %vm2159 = vcmp.lt.s32.totalorder %v2157, 256
        %vm2160 = vmand %vm2158, %vm2159
        %2161 = vst.msk [vmem:[%s271] sm:$0x3] %vm2160, %v2139
        %2162 = vst.msk [vmem:[%s271 + $0x2] sm:$0x3] %vm2160, %v2154
        %s2163 = sand.u32 %s141, 1
        %s2164 = scalar_lea.sflag [#allocation4], %s2163
        %s2165 = sand.u32 %s141, 1
        %s2166 = smul.addr %s2165, 4
        %s2167 = scalar_lea.vmem [#allocation8], %s2166
        // Predicated region
        $region53: #{tpu_custom_call.1} parent=39 // pred_check
          %p2168 = pneg %p151
        $region54: #{tpu_custom_call.1} parent=39 // pred_check_branch
          %2170 = sbr.rel (%p2168) target = $region56
        $region55: #{tpu_custom_call.1} parent=39 // pred_region
          %s2172 = ssub.s32 64, 64
          %2173 = vsyncadd %s2164, %s2172
          %s2174 = smul.addr %s23, 4
          %s2175 = smul.addr %s2174, 16
          %s2176 = scalar_lea.hbm %s5, %s2175
          %s2177 = sshll.u32 %s2167, 4
          %s2178 = int_to_ptr.vmem [resolvable:$true] %s2177
          %2183 = dma.vmem_to_hbm [thread:$0]  %s2178, 64, %s2176, %s2164, 32, 32, 2
        $region56: #{tpu_custom_call.1} parent=39 // pred_fallthru
          _
      $region40: #{tpu_custom_call.1} parent=5 // pred_fallthru
        _
      %p2184 = scmp.le.s32.totalorder 2, %s18
      // Predicated region
      $region57: #{tpu_custom_call.1} parent=5 // pred_check
        %p2185 = pneg %p2184
      $region58: #{tpu_custom_call.1} parent=5 // pred_check_branch
        %2187 = sbr.rel (%p2185) target = $region60
      $region59: #{tpu_custom_call.1} parent=5 // pred_region
        %s2188 = ssub.s32 %s18, 2
        // Predicated region
        $region61: #{tpu_custom_call.1} parent=59 // pred_check
          %p2189 = pneg %p157
        $region62: #{tpu_custom_call.1} parent=59 // pred_check_branch
          %2191 = sbr.rel (%p2189) target = $region64
        $region63: #{tpu_custom_call.1} parent=59 // pred_region
          %s2192 = sand.u32 %s142, 1
          %s2193 = scalar_lea.sflag [#allocation4], %s2192
          %s2194 = sand.u32 %s142, 1
          %s2195 = smul.addr %s2194, 4
          %s2196 = scalar_lea.vmem [#allocation8], %s2195
          %2197 = dma.done %s2193, 64
        $region64: #{tpu_custom_call.1} parent=59 // pred_fallthru
          _
      $region60: #{tpu_custom_call.1} parent=5 // pred_fallthru
        _
    $region6: #{tpu_custom_call.1} parent=1 // loop_footer
      %s22 = sadd.s32 1, %s18
    $region7: #{tpu_custom_call.1} parent=1 // loop_footer_branch
      %17 = sbr.rel target = $region3
    $region8: #{tpu_custom_call.1} parent=1 // loop_exit
      _
    %2198 = vsyncpa [#allocation3], 1
    %s2199 = scalar_lea.sflag [#allocation3], 1
    %2200 = vsyncpa %s2199, 1
    %2201 = vsyncpa [#allocation6], 1
    %2202 = vsyncpa [#allocation4], 1
    %s2203 = scalar_lea.sflag [#allocation4], 1
    %2204 = vsyncpa %s2203, 1

</llo_original>
